<compile_context>
chip_gen: v5e
topology: v5e:2x2
jax: 0.10.0
libtpu: 0.0.40
codegen_flags: <defaults>
</compile_context>

<pallas_src>
import jax
import jax.numpy as jnp
from jax.experimental import pallas as pl
from jax.experimental.pallas import tpu as pltpu

K_IN = 784     # true contraction dim (28*28), NOT padded
H_PAD = 512    # hidden 500 -> 512 (lane alignment for GEMM1 output / GEMM2 K)
O_PAD = 128    # out 10 -> 128 (lane-dense output store)


def _round_up(n, m):
    return ((n + m - 1) // m) * m


def _mlp_kernel(x_ref, w1_ref, b1_ref, w2_ref, b2_ref, out_ref):
    # x_ref:  (TB, 784)  f32   -- read once from HBM, cast to bf16 here
    # w1_ref: (784, 512) bf16  -- pre-transposed, zero-padded cols, resident
    # b1_ref: (1, 512)   f32   -- resident
    # w2_ref: (512, 128) bf16  -- pre-transposed, zero-padded, resident
    # b2_ref: (1, 128)   f32   -- resident
    # out_ref:(TB, 128)  bf16  -- lane-dense; cols 10..127 are zero-ish junk padding of b2 (zeros)
    x = x_ref[...].astype(jnp.bfloat16)
    h = jnp.dot(x, w1_ref[...], preferred_element_type=jnp.float32)
    h = jnp.maximum(h + b1_ref[...], 0.0)                    # bias + ReLU in f32
    o = jnp.dot(h.astype(jnp.bfloat16), w2_ref[...],
                preferred_element_type=jnp.float32)
    out_ref[...] = (o + b2_ref[...]).astype(out_ref.dtype)


def prepare_params(w1, b1, w2, b2):
    """One-time layout prep (cache the result; do NOT redo per forward call).

    w1: (500, 784), b1: (500,), w2: (10, 500), b2: (10,)  -- PyTorch layout.
    Zero padding of the hidden/output dims keeps the padded math exact.
    """
    w1t = jnp.zeros((K_IN, H_PAD), jnp.bfloat16)
    w1t = w1t.at[:, :500].set(w1.T.astype(jnp.bfloat16))
    b1p = jnp.zeros((1, H_PAD), jnp.float32).at[0, :500].set(b1.astype(jnp.float32))

    w2t = jnp.zeros((H_PAD, O_PAD), jnp.bfloat16)
    w2t = w2t.at[:500, :10].set(w2.T.astype(jnp.bfloat16))
    b2p = jnp.zeros((1, O_PAD), jnp.float32).at[0, :10].set(b2.astype(jnp.float32))
    return w1t, b1p, w2t, b2p


def net_forward(x, packed_params, *, tb=1024):
    """Forward pass of Net. x: (..., 1, 28, 28) or (..., 784). Returns (B, 10) f32."""
    w1t, b1p, w2t, b2p = packed_params

    x2d = x.reshape(-1, K_IN).astype(jnp.float32)   # x.view(-1, 784)
    B = x2d.shape[0]

    # Batch tile: multiple of 16 (bf16 sublane packing for the output tile),
    # capped at `tb`, and chosen so the grid has >= 2 steps when the batch is
    # big enough (v7x: 2 TensorCores share the "parallel" batch axis).
    B16 = _round_up(max(B, 1), 16)
    TB = min(tb, max(16, _round_up(-(-B16 // 2), 16)))
    Bp = _round_up(B, TB)

    # Only the batch dim is padded (and only when needed); K stays exact at 784,
    # so padded rows can never contaminate real rows through the contraction.
    if Bp != B:
        x2d = jnp.pad(x2d, ((0, Bp - B), (0, 0)))

    out_p = pl.pallas_call(
        _mlp_kernel,
        out_shape=jax.ShapeDtypeStruct((Bp, O_PAD), jnp.bfloat16),
        grid=(Bp // TB,),
        in_specs=[
            pl.BlockSpec((TB, K_IN), lambda i: (i, 0)),      # x: marches over batch
            pl.BlockSpec((K_IN, H_PAD), lambda i: (0, 0)),   # W1: resident (no re-DMA)
            pl.BlockSpec((1, H_PAD), lambda i: (0, 0)),      # b1: resident
            pl.BlockSpec((H_PAD, O_PAD), lambda i: (0, 0)),  # W2: resident
            pl.BlockSpec((1, O_PAD), lambda i: (0, 0)),      # b2: resident
        ],
        out_specs=pl.BlockSpec((TB, O_PAD), lambda i: (i, 0)),
        compiler_params=pltpu.CompilerParams(
            dimension_semantics=("parallel",),
            vmem_limit_bytes=32 * 1024 * 1024,   # safe headroom on v5e/v6e/v7x
        ),
    )(x2d, w1t, b1p, w2t, b2p)

    return out_p[:B, :10].astype(jnp.float32)


def init_params(key):
    """Deterministic init matching nn.Linear shapes (Kaiming-uniform-ish)."""
    k1, k2, k3, k4 = jax.random.split(key, 4)
    lim1 = 1.0 / jnp.sqrt(784.0)
    lim2 = 1.0 / jnp.sqrt(500.0)
    w1 = jax.random.uniform(k1, (500, 784), jnp.float32, -lim1, lim1)
    b1 = jax.random.uniform(k2, (500,), jnp.float32, -lim1, lim1)
    w2 = jax.random.uniform(k3, (10, 500), jnp.float32, -lim2, lim2)
    b2 = jax.random.uniform(k4, (10,), jnp.float32, -lim2, lim2)
    return w1, b1, w2, b2


if __name__ == "__main__":
    key = jax.random.PRNGKey(0)
    kx, kp = jax.random.split(key)
    # Small MNIST-like batch: (B, 1, 28, 28) NCHW, flattened inside forward.
    B = 8
    x = jax.random.normal(kx, (B, 1, 28, 28), jnp.float32)
    w1, b1, w2, b2 = init_params(kp)

    packed = prepare_params(w1, b1, w2, b2)   # one-time layout prep (cached)
    out = net_forward(x, packed)
    out = jax.block_until_ready(out)

    # Reference check in plain JAX (f32). Tolerance loosened for bf16 weights/
    # activations/output.
    x2d = x.reshape(-1, 784)
    ref = jnp.maximum(x2d @ w1.T + b1, 0.0) @ w2.T + b2
    assert out.shape == (B, 10)
    assert jnp.allclose(out, ref, atol=5e-2, rtol=5e-2), "mismatch vs reference"

    print("KERNEL_OK")
</pallas_src>

<mosaic_0001>
module attributes {stable_mosaic.version = 11 : i64} {
  func.func @_mlp_kernel(%arg0: i32, %arg1: memref<16x784xf32, #tpu.memory_space<vmem>>, %arg2: memref<784x512xbf16, #tpu.memory_space<vmem>>, %arg3: memref<1x512xf32, #tpu.memory_space<vmem>>, %arg4: memref<512x128xbf16, #tpu.memory_space<vmem>>, %arg5: memref<1x128xf32, #tpu.memory_space<vmem>>, %arg6: memref<16x128xbf16, #tpu.memory_space<vmem>>) attributes {dimension_semantics = [#tpu.dimension_semantics<parallel>], iteration_bounds = array<i64: 1>, scalar_prefetch = 0 : i64, scratch_operands = 0 : i64, tpu.core_type = #tpu.core_type<tc>, window_params = [{transform_indices = @transform_0, window_bounds = array<i64: 16, 784>}, {pipeline_mode = #tpu.pipeline_mode<synchronous>, transform_indices = @transform_1, window_bounds = array<i64: 784, 512>}, {pipeline_mode = #tpu.pipeline_mode<synchronous>, transform_indices = @transform_2, window_bounds = array<i64: 1, 512>}, {pipeline_mode = #tpu.pipeline_mode<synchronous>, transform_indices = @transform_3, window_bounds = array<i64: 512, 128>}, {pipeline_mode = #tpu.pipeline_mode<synchronous>, transform_indices = @transform_4, window_bounds = array<i64: 1, 128>}, {transform_indices = @transform_5, window_bounds = array<i64: 16, 128>}]} {
    %c0 = arith.constant 0 : index
    %c0_0 = arith.constant 0 : index
    %0 = vector.load %arg1[%c0, %c0_0] : memref<16x784xf32, #tpu.memory_space<vmem>>, vector<16x784xf32>
    %1 = arith.truncf %0 : vector<16x784xf32> to vector<16x784xbf16>
    %c0_1 = arith.constant 0 : index
    %c0_2 = arith.constant 0 : index
    %2 = vector.load %arg2[%c0_1, %c0_2] : memref<784x512xbf16, #tpu.memory_space<vmem>>, vector<784x512xbf16>
    %cst = arith.constant dense<0.000000e+00> : vector<16x512xf32>
    %3 = tpu.matmul %1, %2, %cst {dimension_numbers = #tpu.dot_dimension_numbers<[1], [0], [0], [1], [0, 0, 1, 1], [], []>} : vector<16x784xbf16>, vector<784x512xbf16>, vector<16x512xf32> -> vector<16x512xf32>
    %c0_3 = arith.constant 0 : index
    %c0_4 = arith.constant 0 : index
    %4 = vector.load %arg3[%c0_3, %c0_4] : memref<1x512xf32, #tpu.memory_space<vmem>>, vector<1x512xf32>
    %5 = vector.broadcast %4 : vector<1x512xf32> to vector<16x512xf32>
    %6 = arith.addf %3, %5 : vector<16x512xf32>
    %cst_5 = arith.constant 0.000000e+00 : f32
    %7 = vector.broadcast %cst_5 : f32 to vector<16x512xf32>
    %8 = arith.maximumf %6, %7 : vector<16x512xf32>
    %9 = arith.truncf %8 : vector<16x512xf32> to vector<16x512xbf16>
    %c0_6 = arith.constant 0 : index
    %c0_7 = arith.constant 0 : index
    %10 = vector.load %arg4[%c0_6, %c0_7] : memref<512x128xbf16, #tpu.memory_space<vmem>>, vector<512x128xbf16>
    %cst_8 = arith.constant dense<0.000000e+00> : vector<16x128xf32>
    %11 = tpu.matmul %9, %10, %cst_8 {dimension_numbers = #tpu.dot_dimension_numbers<[1], [0], [0], [1], [0, 0, 1, 1], [], []>} : vector<16x512xbf16>, vector<512x128xbf16>, vector<16x128xf32> -> vector<16x128xf32>
    %c0_9 = arith.constant 0 : index
    %c0_10 = arith.constant 0 : index
    %12 = vector.load %arg5[%c0_9, %c0_10] : memref<1x128xf32, #tpu.memory_space<vmem>>, vector<1x128xf32>
    %13 = vector.broadcast %12 : vector<1x128xf32> to vector<16x128xf32>
    %14 = arith.addf %11, %13 : vector<16x128xf32>
    %15 = arith.truncf %14 : vector<16x128xf32> to vector<16x128xbf16>
    %c0_11 = arith.constant 0 : index
    %c0_12 = arith.constant 0 : index
    %16 = vector.load %arg6[%c0_11, %c0_12] : memref<16x128xbf16, #tpu.memory_space<vmem>>, vector<16x128xbf16>
    tpu.vector_store %arg6[%c0_11, %c0_12], %15 {strides = array<i32>} : memref<16x128xbf16, #tpu.memory_space<vmem>>, vector<16x128xbf16>,
    return
  }
  func.func @transform_0(%arg0: i32) -> (i32, i32) {
    %c0_i32 = arith.constant 0 : i32
    %c0_i32_0 = arith.constant 0 : i32
    return %arg0, %c0_i32 : i32, i32
  }
  func.func @transform_1(%arg0: i32) -> (i32, i32) {
    %c0_i32 = arith.constant 0 : i32
    %c0_i32_0 = arith.constant 0 : i32
    %c0_i32_1 = arith.constant 0 : i32
    return %c0_i32, %c0_i32_0 : i32, i32
  }
  func.func @transform_2(%arg0: i32) -> (i32, i32) {
    %c0_i32 = arith.constant 0 : i32
    %c0_i32_0 = arith.constant 0 : i32
    %c0_i32_1 = arith.constant 0 : i32
    return %c0_i32, %c0_i32_0 : i32, i32
  }
  func.func @transform_3(%arg0: i32) -> (i32, i32) {
    %c0_i32 = arith.constant 0 : i32
    %c0_i32_0 = arith.constant 0 : i32
    %c0_i32_1 = arith.constant 0 : i32
    return %c0_i32, %c0_i32_0 : i32, i32
  }
  func.func @transform_4(%arg0: i32) -> (i32, i32) {
    %c0_i32 = arith.constant 0 : i32
    %c0_i32_0 = arith.constant 0 : i32
    %c0_i32_1 = arith.constant 0 : i32
    return %c0_i32, %c0_i32_0 : i32, i32
  }
  func.func @transform_5(%arg0: i32) -> (i32, i32) {
    %c0_i32 = arith.constant 0 : i32
    %c0_i32_0 = arith.constant 0 : i32
    return %arg0, %c0_i32 : i32, i32
  }
}

</mosaic_0001>

<llo_original>
// kernel: tpu_custom_call.1
$region0: #{tpu_custom_call.1}
  #allocation0 [shape = 'u32[]', space=smem, size = 0x4, offset = 0x4, fixed_abs, tag = 'smem constant byte address 0x4 - core index']
  #allocation1 [shape = 'u32[72,128]{1,0:T(1,128)}', space=vmem, size = 0x9000, scoped, tag = 'internal scratch']
  %s0 = inlined_call_operand.hbm [shape: f32[16,784], index: 0, kind: input, shape index: {}]
  %s1 = inlined_call_operand.hbm [shape: bf16[784,512], index: 1, kind: input, shape index: {}]
  %s2 = inlined_call_operand.hbm [shape: f32[1,512], index: 2, kind: input, shape index: {}]
  %s3 = inlined_call_operand.hbm [shape: bf16[512,128], index: 3, kind: input, shape index: {}]
  %s4 = inlined_call_operand.vmem [shape: f32[1,128], index: 4, kind: input, shape index: {}]
  %s5 = inlined_call_operand.hbm [shape: bf16[16,128], index: 5, kind: output, shape index: {}]
  %s6 = sld [smem:[#allocation0]]
  $region46: #{tpu_custom_call.1} parent=0
    _
  %s8 = ssub.s32 1, %s6
  %s9 = scalar_select 0, %s8, %s6
  $region1: #{tpu_custom_call.1} parent=0
    #allocation2 [shape = 'u8[57344]{0}', space=vmem, size = 0xe000, scoped, tag = 'input window, operand 0, single buffered']
    #allocation3 [shape = 's32[1]{0}', space=sflag, size = 0x4, scoped, tag = 'scoped memory for tpu_custom_call.1']
    #allocation4 [shape = 's32[1]{0}', space=sflag, size = 0x4, scoped, tag = 'scoped memory for tpu_custom_call.1']
    #allocation5 [shape = 'u8[802816]{0}', space=vmem, size = 0xc4000, scoped, tag = 'input window, operand 1, single buffered']
    #allocation6 [shape = 's32[1]{0}', space=sflag, size = 0x4, scoped, tag = 'scoped memory for tpu_custom_call.1']
    #allocation7 [shape = 'u8[2048]{0}', space=vmem, size = 0x800, scoped, tag = 'input window, operand 2, single buffered']
    #allocation8 [shape = 'u8[131072]{0}', space=vmem, size = 0x20000, scoped, tag = 'input window, operand 3, single buffered']
    #allocation9 [shape = 's32[1]{0}', space=sflag, size = 0x4, scoped, tag = 'scoped memory for tpu_custom_call.1']
    #allocation10 [shape = 'u8[4096]{0}', space=vmem, size = 0x1000, scoped, tag = 'output window, operand 0, single buffered']
    %10 = vsyncpa [#allocation3], 0
    %11 = vsyncpa [#allocation6], 0
    %12 = vsyncpa [#allocation9], 0
    %13 = vsyncpa [#allocation4], 0
    // Predicated region
    $region2: #{tpu_custom_call.1} parent=1 // pred_check
      _
    $region3: #{tpu_custom_call.1} parent=1 // pred_check_branch
      %15 = sbr.rel (0) target = $region5
    $region4: #{tpu_custom_call.1} parent=1 // pred_region
      %17 = vsyncadd [#allocation3], 0
      %s18 = sshll.u32 %s0, 4
      %s19 = int_to_ptr.hbm [resolvable:$true] %s18
      %s20 = sshll.u32 [#allocation2], 4
      %s21 = int_to_ptr.vmem [resolvable:$true] %s20
      %26 = dma.hbm_to_vmem [thread:$0]  %s19, 1792, %s21, [#allocation3], 896, 896, 56
    $region5: #{tpu_custom_call.1} parent=1 // pred_fallthru
      _
    // Predicated region
    $region6: #{tpu_custom_call.1} parent=1 // pred_check
      _
    $region7: #{tpu_custom_call.1} parent=1 // pred_check_branch
      %28 = sbr.rel (0) target = $region9
    $region8: #{tpu_custom_call.1} parent=1 // pred_region
      %30 = vsyncadd [#allocation6], 0
      %s31 = sshll.u32 %s1, 4
      %s32 = int_to_ptr.hbm [resolvable:$true] %s31
      %s33 = sshll.u32 [#allocation5], 4
      %s34 = int_to_ptr.vmem [resolvable:$true] %s33
      %39 = dma.hbm_to_vmem [thread:$0]  %s32, 25088, %s34, [#allocation6], 256, 256, 16
    $region9: #{tpu_custom_call.1} parent=1 // pred_fallthru
      _
    // Predicated region
    $region10: #{tpu_custom_call.1} parent=1 // pred_check
      _
    $region11: #{tpu_custom_call.1} parent=1 // pred_check_branch
      %41 = sbr.rel (0) target = $region13
    $region12: #{tpu_custom_call.1} parent=1 // pred_region
      %43 = vsyncadd [#allocation6], 0
      %s45 = sshll.u32 %s2, 4
      %s46 = int_to_ptr.hbm [resolvable:$true] %s45
      %s47 = sshll.u32 [#allocation7], 4
      %s48 = int_to_ptr.vmem [resolvable:$true] %s47
      %50 = dma.hbm_to_vmem [thread:$0]  %s46, 64, %s48, [#allocation6]
    $region13: #{tpu_custom_call.1} parent=1 // pred_fallthru
      _
    // Predicated region
    $region14: #{tpu_custom_call.1} parent=1 // pred_check
      _
    $region15: #{tpu_custom_call.1} parent=1 // pred_check_branch
      %52 = sbr.rel (0) target = $region17
    $region16: #{tpu_custom_call.1} parent=1 // pred_region
      %54 = vsyncadd [#allocation9], 0
      %s55 = sshll.u32 %s3, 4
      %s56 = int_to_ptr.hbm [resolvable:$true] %s55
      %s57 = sshll.u32 [#allocation8], 4
      %s58 = int_to_ptr.vmem [resolvable:$true] %s57
      %63 = dma.hbm_to_vmem [thread:$0]  %s56, 4096, %s58, [#allocation9], 64, 64, 4
    $region17: #{tpu_custom_call.1} parent=1 // pred_fallthru
      _
    // Predicated region
    $region18: #{tpu_custom_call.1} parent=1 // pred_check
      _
    $region19: #{tpu_custom_call.1} parent=1 // pred_check_branch
      %65 = sbr.rel (0) target = $region21
    $region20: #{tpu_custom_call.1} parent=1 // pred_region
      _
    $region21: #{tpu_custom_call.1} parent=1 // pred_fallthru
      _
    // Predicated region
    $region22: #{tpu_custom_call.1} parent=1 // pred_check
      _
    $region23: #{tpu_custom_call.1} parent=1 // pred_check_branch
      %67 = sbr.rel (0) target = $region25
    $region24: #{tpu_custom_call.1} parent=1 // pred_region
      %69 = dma.done [#allocation3], 1792
    $region25: #{tpu_custom_call.1} parent=1 // pred_fallthru
      _
    // Predicated region
    $region26: #{tpu_custom_call.1} parent=1 // pred_check
      _
    $region27: #{tpu_custom_call.1} parent=1 // pred_check_branch
      %71 = sbr.rel (0) target = $region29
    $region28: #{tpu_custom_call.1} parent=1 // pred_region
      %73 = dma.done [#allocation6], 25088
    $region29: #{tpu_custom_call.1} parent=1 // pred_fallthru
      _
    // Predicated region
    $region30: #{tpu_custom_call.1} parent=1 // pred_check
      _
    $region31: #{tpu_custom_call.1} parent=1 // pred_check_branch
      %75 = sbr.rel (0) target = $region33
    $region32: #{tpu_custom_call.1} parent=1 // pred_region
      %77 = dma.done [#allocation6], 64
    $region33: #{tpu_custom_call.1} parent=1 // pred_fallthru
      _
    // Predicated region
    $region34: #{tpu_custom_call.1} parent=1 // pred_check
      _
    $region35: #{tpu_custom_call.1} parent=1 // pred_check_branch
      %79 = sbr.rel (0) target = $region37
    $region36: #{tpu_custom_call.1} parent=1 // pred_region
      %81 = dma.done [#allocation9], 4096
    $region37: #{tpu_custom_call.1} parent=1 // pred_fallthru
      _
    %v83 = vld [vmem:[#allocation2] sm:$0xff]
    %v84 = vld [vmem:[#allocation2 + $0x8] sm:$0xff]
    %v85 = vld [vmem:[#allocation2 + $0x10] sm:$0xff]
    %v86 = vld [vmem:[#allocation2 + $0x18] sm:$0xff]
    %v87 = vld [vmem:[#allocation2 + $0x20] sm:$0xff]
    %v88 = vld [vmem:[#allocation2 + $0x28] sm:$0xff]
    %v89 = vld [vmem:[#allocation2 + $0x30] sm:$0xff]
    %v90 = vld [vmem:[#allocation2 + $0x38] sm:$0xff]
    %v91 = vld [vmem:[#allocation2 + $0x40] sm:$0xff]
    %v92 = vld [vmem:[#allocation2 + $0x48] sm:$0xff]
    %v93 = vld [vmem:[#allocation2 + $0x50] sm:$0xff]
    %v94 = vld [vmem:[#allocation2 + $0x58] sm:$0xff]
    %v95 = vld [vmem:[#allocation2 + $0x60] sm:$0xff]
    %v96 = vld [vmem:[#allocation2 + $0x68] sm:$0xff]
    %v97 = vpack.c.bf16 %v90, %v83
    %v98 = vpack.c.bf16 %v91, %v84
    %v99 = vpack.c.bf16 %v92, %v85
    %v100 = vpack.c.bf16 %v93, %v86
    %v101 = vpack.c.bf16 %v94, %v87
    %v102 = vpack.c.bf16 %v95, %v88
    %v103 = vpack.c.bf16 %v96, %v89
    %v104 = vld [vmem:[#allocation5] sm:$0xff]
    %v105 = vld [vmem:[#allocation5 + $0x8] sm:$0xff]
    %v106 = vld [vmem:[#allocation5 + $0x10] sm:$0xff]
    %v107 = vld [vmem:[#allocation5 + $0x18] sm:$0xff]
    %v108 = vld [vmem:[#allocation5 + $0x20] sm:$0xff]
    %v109 = vld [vmem:[#allocation5 + $0x28] sm:$0xff]
    %v110 = vld [vmem:[#allocation5 + $0x30] sm:$0xff]
    %v111 = vld [vmem:[#allocation5 + $0x38] sm:$0xff]
    %v112 = vld [vmem:[#allocation5 + $0x40] sm:$0xff]
    %v113 = vld [vmem:[#allocation5 + $0x48] sm:$0xff]
    %v114 = vld [vmem:[#allocation5 + $0x50] sm:$0xff]
    %v115 = vld [vmem:[#allocation5 + $0x58] sm:$0xff]
    %v116 = vld [vmem:[#allocation5 + $0x60] sm:$0xff]
    %v117 = vld [vmem:[#allocation5 + $0x68] sm:$0xff]
    %v118 = vld [vmem:[#allocation5 + $0x70] sm:$0xff]
    %v119 = vld [vmem:[#allocation5 + $0x78] sm:$0xff]
    %v120 = vld [vmem:[#allocation5 + $0x80] sm:$0xff]
    %v121 = vld [vmem:[#allocation5 + $0x88] sm:$0xff]
    %v122 = vld [vmem:[#allocation5 + $0x90] sm:$0xff]
    %v123 = vld [vmem:[#allocation5 + $0x98] sm:$0xff]
    %v124 = vld [vmem:[#allocation5 + $0xa0] sm:$0xff]
    %v125 = vld [vmem:[#allocation5 + $0xa8] sm:$0xff]
    %v126 = vld [vmem:[#allocation5 + $0xb0] sm:$0xff]
    %v127 = vld [vmem:[#allocation5 + $0xb8] sm:$0xff]
    %v128 = vld [vmem:[#allocation5 + $0xc0] sm:$0xff]
    %v129 = vld [vmem:[#allocation5 + $0xc8] sm:$0xff]
    %v130 = vld [vmem:[#allocation5 + $0xd0] sm:$0xff]
    %v131 = vld [vmem:[#allocation5 + $0xd8] sm:$0xff]
    %v132 = vld [vmem:[#allocation5 + $0xe0] sm:$0xff]
    %v133 = vld [vmem:[#allocation5 + $0xe8] sm:$0xff]
    %v134 = vld [vmem:[#allocation5 + $0xf0] sm:$0xff]
    %v135 = vld [vmem:[#allocation5 + $0xf8] sm:$0xff]
    %v136 = vld [vmem:[#allocation5 + $0x100] sm:$0xff]
    %v137 = vld [vmem:[#allocation5 + $0x108] sm:$0xff]
    %v138 = vld [vmem:[#allocation5 + $0x110] sm:$0xff]
    %v139 = vld [vmem:[#allocation5 + $0x118] sm:$0xff]
    %v140 = vld [vmem:[#allocation5 + $0x120] sm:$0xff]
    %v141 = vld [vmem:[#allocation5 + $0x128] sm:$0xff]
    %v142 = vld [vmem:[#allocation5 + $0x130] sm:$0xff]
    %v143 = vld [vmem:[#allocation5 + $0x138] sm:$0xff]
    %v144 = vld [vmem:[#allocation5 + $0x140] sm:$0xff]
    %v145 = vld [vmem:[#allocation5 + $0x148] sm:$0xff]
    %v146 = vld [vmem:[#allocation5 + $0x150] sm:$0xff]
    %v147 = vld [vmem:[#allocation5 + $0x158] sm:$0xff]
    %v148 = vld [vmem:[#allocation5 + $0x160] sm:$0xff]
    %v149 = vld [vmem:[#allocation5 + $0x168] sm:$0xff]
    %v150 = vld [vmem:[#allocation5 + $0x170] sm:$0xff]
    %v151 = vld [vmem:[#allocation5 + $0x178] sm:$0xff]
    %v152 = vld [vmem:[#allocation5 + $0x180] sm:$0xff]
    %v153 = vld [vmem:[#allocation5 + $0x188] sm:$0xff]
    %v154 = vld [vmem:[#allocation5 + $0x190] sm:$0xff]
    %v155 = vld [vmem:[#allocation5 + $0x198] sm:$0xff]
    %v156 = vld [vmem:[#allocation5 + $0x1a0] sm:$0xff]
    %v157 = vld [vmem:[#allocation5 + $0x1a8] sm:$0xff]
    %v158 = vld [vmem:[#allocation5 + $0x1b0] sm:$0xff]
    %v159 = vld [vmem:[#allocation5 + $0x1b8] sm:$0xff]
    %v160 = vld [vmem:[#allocation5 + $0x1c0] sm:$0xff]
    %v161 = vld [vmem:[#allocation5 + $0x1c8] sm:$0xff]
    %v162 = vld [vmem:[#allocation5 + $0x1d0] sm:$0xff]
    %v163 = vld [vmem:[#allocation5 + $0x1d8] sm:$0xff]
    %v164 = vld [vmem:[#allocation5 + $0x1e0] sm:$0xff]
    %v165 = vld [vmem:[#allocation5 + $0x1e8] sm:$0xff]
    %v166 = vld [vmem:[#allocation5 + $0x1f0] sm:$0xff]
    %v167 = vld [vmem:[#allocation5 + $0x1f8] sm:$0xff]
    %v168 = vld [vmem:[#allocation5 + $0x200] sm:$0xff]
    %v169 = vld [vmem:[#allocation5 + $0x208] sm:$0xff]
    %v170 = vld [vmem:[#allocation5 + $0x210] sm:$0xff]
    %v171 = vld [vmem:[#allocation5 + $0x218] sm:$0xff]
    %v172 = vld [vmem:[#allocation5 + $0x220] sm:$0xff]
    %v173 = vld [vmem:[#allocation5 + $0x228] sm:$0xff]
    %v174 = vld [vmem:[#allocation5 + $0x230] sm:$0xff]
    %v175 = vld [vmem:[#allocation5 + $0x238] sm:$0xff]
    %v176 = vld [vmem:[#allocation5 + $0x240] sm:$0xff]
    %v177 = vld [vmem:[#allocation5 + $0x248] sm:$0xff]
    %v178 = vld [vmem:[#allocation5 + $0x250] sm:$0xff]
    %v179 = vld [vmem:[#allocation5 + $0x258] sm:$0xff]
    %v180 = vld [vmem:[#allocation5 + $0x260] sm:$0xff]
    %v181 = vld [vmem:[#allocation5 + $0x268] sm:$0xff]
    %v182 = vld [vmem:[#allocation5 + $0x270] sm:$0xff]
    %v183 = vld [vmem:[#allocation5 + $0x278] sm:$0xff]
    %v184 = vld [vmem:[#allocation5 + $0x280] sm:$0xff]
    %v185 = vld [vmem:[#allocation5 + $0x288] sm:$0xff]
    %v186 = vld [vmem:[#allocation5 + $0x290] sm:$0xff]
    %v187 = vld [vmem:[#allocation5 + $0x298] sm:$0xff]
    %v188 = vld [vmem:[#allocation5 + $0x2a0] sm:$0xff]
    %v189 = vld [vmem:[#allocation5 + $0x2a8] sm:$0xff]
    %v190 = vld [vmem:[#allocation5 + $0x2b0] sm:$0xff]
    %v191 = vld [vmem:[#allocation5 + $0x2b8] sm:$0xff]
    %v192 = vld [vmem:[#allocation5 + $0x2c0] sm:$0xff]
    %v193 = vld [vmem:[#allocation5 + $0x2c8] sm:$0xff]
    %v194 = vld [vmem:[#allocation5 + $0x2d0] sm:$0xff]
    %v195 = vld [vmem:[#allocation5 + $0x2d8] sm:$0xff]
    %v196 = vld [vmem:[#allocation5 + $0x2e0] sm:$0xff]
    %v197 = vld [vmem:[#allocation5 + $0x2e8] sm:$0xff]
    %v198 = vld [vmem:[#allocation5 + $0x2f0] sm:$0xff]
    %v199 = vld [vmem:[#allocation5 + $0x2f8] sm:$0xff]
    %v200 = vld [vmem:[#allocation5 + $0x300] sm:$0xff]
    %v201 = vld [vmem:[#allocation5 + $0x308] sm:$0xff]
    %v202 = vld [vmem:[#allocation5 + $0x310] sm:$0xff]
    %v203 = vld [vmem:[#allocation5 + $0x318] sm:$0xff]
    %v204 = vld [vmem:[#allocation5 + $0x320] sm:$0xff]
    %v205 = vld [vmem:[#allocation5 + $0x328] sm:$0xff]
    %v206 = vld [vmem:[#allocation5 + $0x330] sm:$0xff]
    %v207 = vld [vmem:[#allocation5 + $0x338] sm:$0xff]
    %v208 = vld [vmem:[#allocation5 + $0x340] sm:$0xff]
    %v209 = vld [vmem:[#allocation5 + $0x348] sm:$0xff]
    %v210 = vld [vmem:[#allocation5 + $0x350] sm:$0xff]
    %v211 = vld [vmem:[#allocation5 + $0x358] sm:$0xff]
    %v212 = vld [vmem:[#allocation5 + $0x360] sm:$0xff]
    %v213 = vld [vmem:[#allocation5 + $0x368] sm:$0xff]
    %v214 = vld [vmem:[#allocation5 + $0x370] sm:$0xff]
    %v215 = vld [vmem:[#allocation5 + $0x378] sm:$0xff]
    %v216 = vld [vmem:[#allocation5 + $0x380] sm:$0xff]
    %v217 = vld [vmem:[#allocation5 + $0x388] sm:$0xff]
    %v218 = vld [vmem:[#allocation5 + $0x390] sm:$0xff]
    %v219 = vld [vmem:[#allocation5 + $0x398] sm:$0xff]
    %v220 = vld [vmem:[#allocation5 + $0x3a0] sm:$0xff]
    %v221 = vld [vmem:[#allocation5 + $0x3a8] sm:$0xff]
    %v222 = vld [vmem:[#allocation5 + $0x3b0] sm:$0xff]
    %v223 = vld [vmem:[#allocation5 + $0x3b8] sm:$0xff]
    %v224 = vld [vmem:[#allocation5 + $0x3c0] sm:$0xff]
    %v225 = vld [vmem:[#allocation5 + $0x3c8] sm:$0xff]
    %v226 = vld [vmem:[#allocation5 + $0x3d0] sm:$0xff]
    %v227 = vld [vmem:[#allocation5 + $0x3d8] sm:$0xff]
    %v228 = vld [vmem:[#allocation5 + $0x3e0] sm:$0xff]
    %v229 = vld [vmem:[#allocation5 + $0x3e8] sm:$0xff]
    %v230 = vld [vmem:[#allocation5 + $0x3f0] sm:$0xff]
    %v231 = vld [vmem:[#allocation5 + $0x3f8] sm:$0xff]
    %v232 = vld [vmem:[#allocation5 + $0x400] sm:$0xff]
    %v233 = vld [vmem:[#allocation5 + $0x408] sm:$0xff]
    %v234 = vld [vmem:[#allocation5 + $0x410] sm:$0xff]
    %v235 = vld [vmem:[#allocation5 + $0x418] sm:$0xff]
    %v236 = vld [vmem:[#allocation5 + $0x420] sm:$0xff]
    %v237 = vld [vmem:[#allocation5 + $0x428] sm:$0xff]
    %v238 = vld [vmem:[#allocation5 + $0x430] sm:$0xff]
    %v239 = vld [vmem:[#allocation5 + $0x438] sm:$0xff]
    %v240 = vld [vmem:[#allocation5 + $0x440] sm:$0xff]
    %v241 = vld [vmem:[#allocation5 + $0x448] sm:$0xff]
    %v242 = vld [vmem:[#allocation5 + $0x450] sm:$0xff]
    %v243 = vld [vmem:[#allocation5 + $0x458] sm:$0xff]
    %v244 = vld [vmem:[#allocation5 + $0x460] sm:$0xff]
    %v245 = vld [vmem:[#allocation5 + $0x468] sm:$0xff]
    %v246 = vld [vmem:[#allocation5 + $0x470] sm:$0xff]
    %v247 = vld [vmem:[#allocation5 + $0x478] sm:$0xff]
    %v248 = vld [vmem:[#allocation5 + $0x480] sm:$0xff]
    %v249 = vld [vmem:[#allocation5 + $0x488] sm:$0xff]
    %v250 = vld [vmem:[#allocation5 + $0x490] sm:$0xff]
    %v251 = vld [vmem:[#allocation5 + $0x498] sm:$0xff]
    %v252 = vld [vmem:[#allocation5 + $0x4a0] sm:$0xff]
    %v253 = vld [vmem:[#allocation5 + $0x4a8] sm:$0xff]
    %v254 = vld [vmem:[#allocation5 + $0x4b0] sm:$0xff]
    %v255 = vld [vmem:[#allocation5 + $0x4b8] sm:$0xff]
    %v256 = vld [vmem:[#allocation5 + $0x4c0] sm:$0xff]
    %v257 = vld [vmem:[#allocation5 + $0x4c8] sm:$0xff]
    %v258 = vld [vmem:[#allocation5 + $0x4d0] sm:$0xff]
    %v259 = vld [vmem:[#allocation5 + $0x4d8] sm:$0xff]
    %v260 = vld [vmem:[#allocation5 + $0x4e0] sm:$0xff]
    %v261 = vld [vmem:[#allocation5 + $0x4e8] sm:$0xff]
    %v262 = vld [vmem:[#allocation5 + $0x4f0] sm:$0xff]
    %v263 = vld [vmem:[#allocation5 + $0x4f8] sm:$0xff]
    %v264 = vld [vmem:[#allocation5 + $0x500] sm:$0xff]
    %v265 = vld [vmem:[#allocation5 + $0x508] sm:$0xff]
    %v266 = vld [vmem:[#allocation5 + $0x510] sm:$0xff]
    %v267 = vld [vmem:[#allocation5 + $0x518] sm:$0xff]
    %v268 = vld [vmem:[#allocation5 + $0x520] sm:$0xff]
    %v269 = vld [vmem:[#allocation5 + $0x528] sm:$0xff]
    %v270 = vld [vmem:[#allocation5 + $0x530] sm:$0xff]
    %v271 = vld [vmem:[#allocation5 + $0x538] sm:$0xff]
    %v272 = vld [vmem:[#allocation5 + $0x540] sm:$0xff]
    %v273 = vld [vmem:[#allocation5 + $0x548] sm:$0xff]
    %v274 = vld [vmem:[#allocation5 + $0x550] sm:$0xff]
    %v275 = vld [vmem:[#allocation5 + $0x558] sm:$0xff]
    %v276 = vld [vmem:[#allocation5 + $0x560] sm:$0xff]
    %v277 = vld [vmem:[#allocation5 + $0x568] sm:$0xff]
    %v278 = vld [vmem:[#allocation5 + $0x570] sm:$0xff]
    %v279 = vld [vmem:[#allocation5 + $0x578] sm:$0xff]
    %v280 = vld [vmem:[#allocation5 + $0x580] sm:$0xff]
    %v281 = vld [vmem:[#allocation5 + $0x588] sm:$0xff]
    %v282 = vld [vmem:[#allocation5 + $0x590] sm:$0xff]
    %v283 = vld [vmem:[#allocation5 + $0x598] sm:$0xff]
    %v284 = vld [vmem:[#allocation5 + $0x5a0] sm:$0xff]
    %v285 = vld [vmem:[#allocation5 + $0x5a8] sm:$0xff]
    %v286 = vld [vmem:[#allocation5 + $0x5b0] sm:$0xff]
    %v287 = vld [vmem:[#allocation5 + $0x5b8] sm:$0xff]
    %v288 = vld [vmem:[#allocation5 + $0x5c0] sm:$0xff]
    %v289 = vld [vmem:[#allocation5 + $0x5c8] sm:$0xff]
    %v290 = vld [vmem:[#allocation5 + $0x5d0] sm:$0xff]
    %v291 = vld [vmem:[#allocation5 + $0x5d8] sm:$0xff]
    %v292 = vld [vmem:[#allocation5 + $0x5e0] sm:$0xff]
    %v293 = vld [vmem:[#allocation5 + $0x5e8] sm:$0xff]
    %v294 = vld [vmem:[#allocation5 + $0x5f0] sm:$0xff]
    %v295 = vld [vmem:[#allocation5 + $0x5f8] sm:$0xff]
    %v296 = vld [vmem:[#allocation5 + $0x600] sm:$0xff]
    %v297 = vld [vmem:[#allocation5 + $0x608] sm:$0xff]
    %v298 = vld [vmem:[#allocation5 + $0x610] sm:$0xff]
    %v299 = vld [vmem:[#allocation5 + $0x618] sm:$0xff]
    %v300 = vld [vmem:[#allocation7] sm:$0xf]
    %v302 = vperm.slane %v300, 0
    %v303 = vperm.slane %v300, 1
    %v304 = vperm.slane %v300, 2
    %v305 = vperm.slane %v300, 3
    %v506 = vunpack.c.l.b16 %v104
    %v507 = vunpack.c.h.b16 %v104
    %v508 = vunpack.c.l.b16 %v105
    %v509 = vunpack.c.h.b16 %v105
    %v510 = vunpack.c.l.b16 %v106
    %v511 = vunpack.c.h.b16 %v106
    %v512 = vunpack.c.l.b16 %v107
    %v513 = vunpack.c.h.b16 %v107
    %v514 = vunpack.c.l.b16 %v108
    %v515 = vunpack.c.h.b16 %v108
    %v516 = vunpack.c.l.b16 %v109
    %v517 = vunpack.c.h.b16 %v109
    %v518 = vunpack.c.l.b16 %v110
    %v519 = vunpack.c.h.b16 %v110
    %v520 = vunpack.c.l.b16 %v111
    %v521 = vunpack.c.h.b16 %v111
    %v522 = vunpack.c.l.b16 %v112
    %v523 = vunpack.c.h.b16 %v112
    %v524 = vunpack.c.l.b16 %v113
    %v525 = vunpack.c.h.b16 %v113
    %v526 = vunpack.c.l.b16 %v114
    %v527 = vunpack.c.h.b16 %v114
    %v528 = vunpack.c.l.b16 %v115
    %v529 = vunpack.c.h.b16 %v115
    %v530 = vunpack.c.l.b16 %v116
    %v531 = vunpack.c.h.b16 %v116
    %v532 = vunpack.c.l.b16 %v117
    %v533 = vunpack.c.h.b16 %v117
    %v534 = vunpack.c.l.b16 %v118
    %v535 = vunpack.c.h.b16 %v118
    %v536 = vunpack.c.l.b16 %v119
    %v537 = vunpack.c.h.b16 %v119
    %v538 = vunpack.c.l.b16 %v120
    %v539 = vunpack.c.h.b16 %v120
    %v540 = vunpack.c.l.b16 %v121
    %v541 = vunpack.c.h.b16 %v121
    %v542 = vunpack.c.l.b16 %v122
    %v543 = vunpack.c.h.b16 %v122
    %v544 = vunpack.c.l.b16 %v123
    %v545 = vunpack.c.h.b16 %v123
    %v546 = vunpack.c.l.b16 %v124
    %v547 = vunpack.c.h.b16 %v124
    %v548 = vunpack.c.l.b16 %v125
    %v549 = vunpack.c.h.b16 %v125
    %v550 = vunpack.c.l.b16 %v126
    %v551 = vunpack.c.h.b16 %v126
    %v552 = vunpack.c.l.b16 %v127
    %v553 = vunpack.c.h.b16 %v127
    %v554 = vunpack.c.l.b16 %v128
    %v555 = vunpack.c.h.b16 %v128
    %v556 = vunpack.c.l.b16 %v129
    %v557 = vunpack.c.h.b16 %v129
    %v558 = vunpack.c.l.b16 %v130
    %v559 = vunpack.c.h.b16 %v130
    %v560 = vunpack.c.l.b16 %v131
    %v561 = vunpack.c.h.b16 %v131
    %v562 = vunpack.c.l.b16 %v132
    %v563 = vunpack.c.h.b16 %v132
    %v564 = vunpack.c.l.b16 %v133
    %v565 = vunpack.c.h.b16 %v133
    %v566 = vunpack.c.l.b16 %v134
    %v567 = vunpack.c.h.b16 %v134
    %v568 = vunpack.c.l.b16 %v135
    %v569 = vunpack.c.h.b16 %v135
    %v570 = vunpack.c.l.b16 %v136
    %v571 = vunpack.c.h.b16 %v136
    %v572 = vunpack.c.l.b16 %v137
    %v573 = vunpack.c.h.b16 %v137
    %v574 = vunpack.c.l.b16 %v138
    %v575 = vunpack.c.h.b16 %v138
    %v576 = vunpack.c.l.b16 %v139
    %v577 = vunpack.c.h.b16 %v139
    %v578 = vunpack.c.l.b16 %v140
    %v579 = vunpack.c.h.b16 %v140
    %v580 = vunpack.c.l.b16 %v141
    %v581 = vunpack.c.h.b16 %v141
    %v582 = vunpack.c.l.b16 %v142
    %v583 = vunpack.c.h.b16 %v142
    %v584 = vunpack.c.l.b16 %v143
    %v585 = vunpack.c.h.b16 %v143
    %v586 = vunpack.c.l.b16 %v144
    %v587 = vunpack.c.h.b16 %v144
    %v588 = vunpack.c.l.b16 %v145
    %v589 = vunpack.c.h.b16 %v145
    %v590 = vunpack.c.l.b16 %v146
    %v591 = vunpack.c.h.b16 %v146
    %v592 = vunpack.c.l.b16 %v147
    %v593 = vunpack.c.h.b16 %v147
    %v594 = vunpack.c.l.b16 %v148
    %v595 = vunpack.c.h.b16 %v148
    %v596 = vunpack.c.l.b16 %v149
    %v597 = vunpack.c.h.b16 %v149
    %v598 = vunpack.c.l.b16 %v150
    %v599 = vunpack.c.h.b16 %v150
    %v600 = vunpack.c.l.b16 %v151
    %v601 = vunpack.c.h.b16 %v151
    %v602 = vunpack.c.l.b16 %v152
    %v603 = vunpack.c.h.b16 %v152
    %v604 = vunpack.c.l.b16 %v153
    %v605 = vunpack.c.h.b16 %v153
    %v606 = vunpack.c.l.b16 %v154
    %v607 = vunpack.c.h.b16 %v154
    %v608 = vunpack.c.l.b16 %v155
    %v609 = vunpack.c.h.b16 %v155
    %v610 = vunpack.c.l.b16 %v156
    %v611 = vunpack.c.h.b16 %v156
    %v612 = vunpack.c.l.b16 %v157
    %v613 = vunpack.c.h.b16 %v157
    %v614 = vunpack.c.l.b16 %v158
    %v615 = vunpack.c.h.b16 %v158
    %v616 = vunpack.c.l.b16 %v159
    %v617 = vunpack.c.h.b16 %v159
    %v618 = vunpack.c.l.b16 %v160
    %v619 = vunpack.c.h.b16 %v160
    %v620 = vunpack.c.l.b16 %v161
    %v621 = vunpack.c.h.b16 %v161
    %v622 = vunpack.c.l.b16 %v162
    %v623 = vunpack.c.h.b16 %v162
    %v624 = vunpack.c.l.b16 %v163
    %v625 = vunpack.c.h.b16 %v163
    %v626 = vunpack.c.l.b16 %v164
    %v627 = vunpack.c.h.b16 %v164
    %v628 = vunpack.c.l.b16 %v165
    %v629 = vunpack.c.h.b16 %v165
    %v630 = vunpack.c.l.b16 %v166
    %v631 = vunpack.c.h.b16 %v166
    %v632 = vunpack.c.l.b16 %v167
    %v633 = vunpack.c.h.b16 %v167
    %v634 = vunpack.c.l.b16 %v168
    %v635 = vunpack.c.h.b16 %v168
    %v636 = vunpack.c.l.b16 %v169
    %v637 = vunpack.c.h.b16 %v169
    %v638 = vunpack.c.l.b16 %v170
    %v639 = vunpack.c.h.b16 %v170
    %v640 = vunpack.c.l.b16 %v171
    %v641 = vunpack.c.h.b16 %v171
    %v642 = vunpack.c.l.b16 %v172
    %v643 = vunpack.c.h.b16 %v172
    %v644 = vunpack.c.l.b16 %v173
    %v645 = vunpack.c.h.b16 %v173
    %v646 = vunpack.c.l.b16 %v174
    %v647 = vunpack.c.h.b16 %v174
    %v648 = vunpack.c.l.b16 %v175
    %v649 = vunpack.c.h.b16 %v175
    %v650 = vunpack.c.l.b16 %v176
    %v651 = vunpack.c.h.b16 %v176
    %v652 = vunpack.c.l.b16 %v177
    %v653 = vunpack.c.h.b16 %v177
    %v654 = vunpack.c.l.b16 %v178
    %v655 = vunpack.c.h.b16 %v178
    %v656 = vunpack.c.l.b16 %v179
    %v657 = vunpack.c.h.b16 %v179
    %v658 = vunpack.c.l.b16 %v180
    %v659 = vunpack.c.h.b16 %v180
    %v660 = vunpack.c.l.b16 %v181
    %v661 = vunpack.c.h.b16 %v181
    %v662 = vunpack.c.l.b16 %v182
    %v663 = vunpack.c.h.b16 %v182
    %v664 = vunpack.c.l.b16 %v183
    %v665 = vunpack.c.h.b16 %v183
    %v666 = vunpack.c.l.b16 %v184
    %v667 = vunpack.c.h.b16 %v184
    %v668 = vunpack.c.l.b16 %v185
    %v669 = vunpack.c.h.b16 %v185
    %v670 = vunpack.c.l.b16 %v186
    %v671 = vunpack.c.h.b16 %v186
    %v672 = vunpack.c.l.b16 %v187
    %v673 = vunpack.c.h.b16 %v187
    %v674 = vunpack.c.l.b16 %v188
    %v675 = vunpack.c.h.b16 %v188
    %v676 = vunpack.c.l.b16 %v189
    %v677 = vunpack.c.h.b16 %v189
    %v678 = vunpack.c.l.b16 %v190
    %v679 = vunpack.c.h.b16 %v190
    %v680 = vunpack.c.l.b16 %v191
    %v681 = vunpack.c.h.b16 %v191
    %v682 = vunpack.c.l.b16 %v192
    %v683 = vunpack.c.h.b16 %v192
    %v684 = vunpack.c.l.b16 %v193
    %v685 = vunpack.c.h.b16 %v193
    %v686 = vunpack.c.l.b16 %v194
    %v687 = vunpack.c.h.b16 %v194
    %v688 = vunpack.c.l.b16 %v195
    %v689 = vunpack.c.h.b16 %v195
    %v690 = vunpack.c.l.b16 %v196
    %v691 = vunpack.c.h.b16 %v196
    %v692 = vunpack.c.l.b16 %v197
    %v693 = vunpack.c.h.b16 %v197
    %v694 = vunpack.c.l.b16 %v198
    %v695 = vunpack.c.h.b16 %v198
    %v696 = vunpack.c.l.b16 %v199
    %v697 = vunpack.c.h.b16 %v199
    %v698 = vunpack.c.l.b16 %v200
    %v699 = vunpack.c.h.b16 %v200
    %v700 = vunpack.c.l.b16 %v201
    %v701 = vunpack.c.h.b16 %v201
    %v702 = vunpack.c.l.b16 %v202
    %v703 = vunpack.c.h.b16 %v202
    %v704 = vunpack.c.l.b16 %v203
    %v705 = vunpack.c.h.b16 %v203
    %v706 = vunpack.c.l.b16 %v204
    %v707 = vunpack.c.h.b16 %v204
    %v708 = vunpack.c.l.b16 %v205
    %v709 = vunpack.c.h.b16 %v205
    %v710 = vunpack.c.l.b16 %v206
    %v711 = vunpack.c.h.b16 %v206
    %v712 = vunpack.c.l.b16 %v207
    %v713 = vunpack.c.h.b16 %v207
    %v714 = vunpack.c.l.b16 %v208
    %v715 = vunpack.c.h.b16 %v208
    %v716 = vunpack.c.l.b16 %v209
    %v717 = vunpack.c.h.b16 %v209
    %v718 = vunpack.c.l.b16 %v210
    %v719 = vunpack.c.h.b16 %v210
    %v720 = vunpack.c.l.b16 %v211
    %v721 = vunpack.c.h.b16 %v211
    %v722 = vunpack.c.l.b16 %v212
    %v723 = vunpack.c.h.b16 %v212
    %v724 = vunpack.c.l.b16 %v213
    %v725 = vunpack.c.h.b16 %v213
    %v726 = vunpack.c.l.b16 %v214
    %v727 = vunpack.c.h.b16 %v214
    %v728 = vunpack.c.l.b16 %v215
    %v729 = vunpack.c.h.b16 %v215
    %v730 = vunpack.c.l.b16 %v216
    %v731 = vunpack.c.h.b16 %v216
    %v732 = vunpack.c.l.b16 %v217
    %v733 = vunpack.c.h.b16 %v217
    %v734 = vunpack.c.l.b16 %v218
    %v735 = vunpack.c.h.b16 %v218
    %v736 = vunpack.c.l.b16 %v219
    %v737 = vunpack.c.h.b16 %v219
    %v738 = vunpack.c.l.b16 %v220
    %v739 = vunpack.c.h.b16 %v220
    %v740 = vunpack.c.l.b16 %v221
    %v741 = vunpack.c.h.b16 %v221
    %v742 = vunpack.c.l.b16 %v222
    %v743 = vunpack.c.h.b16 %v222
    %v744 = vunpack.c.l.b16 %v223
    %v745 = vunpack.c.h.b16 %v223
    %v746 = vunpack.c.l.b16 %v224
    %v747 = vunpack.c.h.b16 %v224
    %v748 = vunpack.c.l.b16 %v225
    %v749 = vunpack.c.h.b16 %v225
    %v750 = vunpack.c.l.b16 %v226
    %v751 = vunpack.c.h.b16 %v226
    %v752 = vunpack.c.l.b16 %v227
    %v753 = vunpack.c.h.b16 %v227
    %v754 = vunpack.c.l.b16 %v228
    %v755 = vunpack.c.h.b16 %v228
    %v756 = vunpack.c.l.b16 %v229
    %v757 = vunpack.c.h.b16 %v229
    %v758 = vunpack.c.l.b16 %v230
    %v759 = vunpack.c.h.b16 %v230
    %v760 = vunpack.c.l.b16 %v231
    %v761 = vunpack.c.h.b16 %v231
    %v762 = vunpack.c.l.b16 %v232
    %v763 = vunpack.c.h.b16 %v232
    %v764 = vunpack.c.l.b16 %v233
    %v765 = vunpack.c.h.b16 %v233
    %v766 = vunpack.c.l.b16 %v234
    %v767 = vunpack.c.h.b16 %v234
    %v768 = vunpack.c.l.b16 %v235
    %v769 = vunpack.c.h.b16 %v235
    %v770 = vunpack.c.l.b16 %v236
    %v771 = vunpack.c.h.b16 %v236
    %v772 = vunpack.c.l.b16 %v237
    %v773 = vunpack.c.h.b16 %v237
    %v774 = vunpack.c.l.b16 %v238
    %v775 = vunpack.c.h.b16 %v238
    %v776 = vunpack.c.l.b16 %v239
    %v777 = vunpack.c.h.b16 %v239
    %v778 = vunpack.c.l.b16 %v240
    %v779 = vunpack.c.h.b16 %v240
    %v780 = vunpack.c.l.b16 %v241
    %v781 = vunpack.c.h.b16 %v241
    %v782 = vunpack.c.l.b16 %v242
    %v783 = vunpack.c.h.b16 %v242
    %v784 = vunpack.c.l.b16 %v243
    %v785 = vunpack.c.h.b16 %v243
    %v786 = vunpack.c.l.b16 %v244
    %v787 = vunpack.c.h.b16 %v244
    %v788 = vunpack.c.l.b16 %v245
    %v789 = vunpack.c.h.b16 %v245
    %v790 = vunpack.c.l.b16 %v246
    %v791 = vunpack.c.h.b16 %v246
    %v792 = vunpack.c.l.b16 %v247
    %v793 = vunpack.c.h.b16 %v247
    %v794 = vunpack.c.l.b16 %v248
    %v795 = vunpack.c.h.b16 %v248
    %v796 = vunpack.c.l.b16 %v249
    %v797 = vunpack.c.h.b16 %v249
    %v798 = vunpack.c.l.b16 %v250
    %v799 = vunpack.c.h.b16 %v250
    %v800 = vunpack.c.l.b16 %v251
    %v801 = vunpack.c.h.b16 %v251
    %v802 = vunpack.c.l.b16 %v252
    %v803 = vunpack.c.h.b16 %v252
    %v804 = vunpack.c.l.b16 %v253
    %v805 = vunpack.c.h.b16 %v253
    %v806 = vunpack.c.l.b16 %v254
    %v807 = vunpack.c.h.b16 %v254
    %v808 = vunpack.c.l.b16 %v255
    %v809 = vunpack.c.h.b16 %v255
    %v810 = vunpack.c.l.b16 %v256
    %v811 = vunpack.c.h.b16 %v256
    %v812 = vunpack.c.l.b16 %v257
    %v813 = vunpack.c.h.b16 %v257
    %v814 = vunpack.c.l.b16 %v258
    %v815 = vunpack.c.h.b16 %v258
    %v816 = vunpack.c.l.b16 %v259
    %v817 = vunpack.c.h.b16 %v259
    %v818 = vunpack.c.l.b16 %v260
    %v819 = vunpack.c.h.b16 %v260
    %v820 = vunpack.c.l.b16 %v261
    %v821 = vunpack.c.h.b16 %v261
    %v822 = vunpack.c.l.b16 %v262
    %v823 = vunpack.c.h.b16 %v262
    %v824 = vunpack.c.l.b16 %v263
    %v825 = vunpack.c.h.b16 %v263
    %v826 = vunpack.c.l.b16 %v264
    %v827 = vunpack.c.h.b16 %v264
    %v828 = vunpack.c.l.b16 %v265
    %v829 = vunpack.c.h.b16 %v265
    %v830 = vunpack.c.l.b16 %v266
    %v831 = vunpack.c.h.b16 %v266
    %v832 = vunpack.c.l.b16 %v267
    %v833 = vunpack.c.h.b16 %v267
    %v834 = vunpack.c.l.b16 %v268
    %v835 = vunpack.c.h.b16 %v268
    %v836 = vunpack.c.l.b16 %v269
    %v837 = vunpack.c.h.b16 %v269
    %v838 = vunpack.c.l.b16 %v270
    %v839 = vunpack.c.h.b16 %v270
    %v840 = vunpack.c.l.b16 %v271
    %v841 = vunpack.c.h.b16 %v271
    %v842 = vunpack.c.l.b16 %v272
    %v843 = vunpack.c.h.b16 %v272
    %v844 = vunpack.c.l.b16 %v273
    %v845 = vunpack.c.h.b16 %v273
    %v846 = vunpack.c.l.b16 %v274
    %v847 = vunpack.c.h.b16 %v274
    %v848 = vunpack.c.l.b16 %v275
    %v849 = vunpack.c.h.b16 %v275
    %v850 = vunpack.c.l.b16 %v276
    %v851 = vunpack.c.h.b16 %v276
    %v852 = vunpack.c.l.b16 %v277
    %v853 = vunpack.c.h.b16 %v277
    %v854 = vunpack.c.l.b16 %v278
    %v855 = vunpack.c.h.b16 %v278
    %v856 = vunpack.c.l.b16 %v279
    %v857 = vunpack.c.h.b16 %v279
    %v858 = vunpack.c.l.b16 %v280
    %v859 = vunpack.c.h.b16 %v280
    %v860 = vunpack.c.l.b16 %v281
    %v861 = vunpack.c.h.b16 %v281
    %v862 = vunpack.c.l.b16 %v282
    %v863 = vunpack.c.h.b16 %v282
    %v864 = vunpack.c.l.b16 %v283
    %v865 = vunpack.c.h.b16 %v283
    %v866 = vunpack.c.l.b16 %v284
    %v867 = vunpack.c.h.b16 %v284
    %v868 = vunpack.c.l.b16 %v285
    %v869 = vunpack.c.h.b16 %v285
    %v870 = vunpack.c.l.b16 %v286
    %v871 = vunpack.c.h.b16 %v286
    %v872 = vunpack.c.l.b16 %v287
    %v873 = vunpack.c.h.b16 %v287
    %v874 = vunpack.c.l.b16 %v288
    %v875 = vunpack.c.h.b16 %v288
    %v876 = vunpack.c.l.b16 %v289
    %v877 = vunpack.c.h.b16 %v289
    %v878 = vunpack.c.l.b16 %v290
    %v879 = vunpack.c.h.b16 %v290
    %v880 = vunpack.c.l.b16 %v291
    %v881 = vunpack.c.h.b16 %v291
    %v882 = vunpack.c.l.b16 %v292
    %v883 = vunpack.c.h.b16 %v292
    %v884 = vunpack.c.l.b16 %v293
    %v885 = vunpack.c.h.b16 %v293
    %v886 = vunpack.c.l.b16 %v294
    %v887 = vunpack.c.h.b16 %v294
    %v888 = vunpack.c.l.b16 %v295
    %v889 = vunpack.c.h.b16 %v295
    %v890 = vunpack.c.l.b16 %v296
    %v891 = vunpack.c.h.b16 %v296
    %v892 = vunpack.c.l.b16 %v297
    %v893 = vunpack.c.h.b16 %v297
    %v894 = vunpack.c.l.b16 %v298
    %v895 = vunpack.c.h.b16 %v298
    %v896 = vunpack.c.l.b16 %v299
    %v897 = vunpack.c.h.b16 %v299
    %v898 = vpack.c.b16 %v510, %v506
    %v899 = vpack.c.b16 %v511, %v507
    %v900 = vpack.c.b16 %v512, %v508
    %v901 = vpack.c.b16 %v513, %v509
    %v902 = vpack.c.b16 %v518, %v514
    %v903 = vpack.c.b16 %v519, %v515
    %v904 = vpack.c.b16 %v520, %v516
    %v905 = vpack.c.b16 %v521, %v517
    %v906 = vpack.c.b16 %v526, %v522
    %v907 = vpack.c.b16 %v527, %v523
    %v908 = vpack.c.b16 %v528, %v524
    %v909 = vpack.c.b16 %v529, %v525
    %v910 = vpack.c.b16 %v534, %v530
    %v911 = vpack.c.b16 %v535, %v531
    %v912 = vpack.c.b16 %v536, %v532
    %v913 = vpack.c.b16 %v537, %v533
    %v914 = vpack.c.b16 %v542, %v538
    %v915 = vpack.c.b16 %v543, %v539
    %v916 = vpack.c.b16 %v544, %v540
    %v917 = vpack.c.b16 %v545, %v541
    %v918 = vpack.c.b16 %v550, %v546
    %v919 = vpack.c.b16 %v551, %v547
    %v920 = vpack.c.b16 %v552, %v548
    %v921 = vpack.c.b16 %v553, %v549
    %v922 = vpack.c.b16 %v558, %v554
    %v923 = vpack.c.b16 %v559, %v555
    %v924 = vpack.c.b16 %v560, %v556
    %v925 = vpack.c.b16 %v561, %v557
    %v926 = vpack.c.b16 %v566, %v562
    %v927 = vpack.c.b16 %v567, %v563
    %v928 = vpack.c.b16 %v568, %v564
    %v929 = vpack.c.b16 %v569, %v565
    %v930 = vpack.c.b16 %v574, %v570
    %v931 = vpack.c.b16 %v575, %v571
    %v932 = vpack.c.b16 %v576, %v572
    %v933 = vpack.c.b16 %v577, %v573
    %v934 = vpack.c.b16 %v582, %v578
    %v935 = vpack.c.b16 %v583, %v579
    %v936 = vpack.c.b16 %v584, %v580
    %v937 = vpack.c.b16 %v585, %v581
    %v938 = vpack.c.b16 %v590, %v586
    %v939 = vpack.c.b16 %v591, %v587
    %v940 = vpack.c.b16 %v592, %v588
    %v941 = vpack.c.b16 %v593, %v589
    %v942 = vpack.c.b16 %v598, %v594
    %v943 = vpack.c.b16 %v599, %v595
    %v944 = vpack.c.b16 %v600, %v596
    %v945 = vpack.c.b16 %v601, %v597
    %v946 = vpack.c.b16 %v606, %v602
    %v947 = vpack.c.b16 %v607, %v603
    %v948 = vpack.c.b16 %v608, %v604
    %v949 = vpack.c.b16 %v609, %v605
    %v950 = vpack.c.b16 %v614, %v610
    %v951 = vpack.c.b16 %v615, %v611
    %v952 = vpack.c.b16 %v616, %v612
    %v953 = vpack.c.b16 %v617, %v613
    %v954 = vpack.c.b16 %v622, %v618
    %v955 = vpack.c.b16 %v623, %v619
    %v956 = vpack.c.b16 %v624, %v620
    %v957 = vpack.c.b16 %v625, %v621
    %v958 = vpack.c.b16 %v630, %v626
    %v959 = vpack.c.b16 %v631, %v627
    %v960 = vpack.c.b16 %v632, %v628
    %v961 = vpack.c.b16 %v633, %v629
    %v962 = vpack.c.b16 %v638, %v634
    %v963 = vpack.c.b16 %v639, %v635
    %v964 = vpack.c.b16 %v640, %v636
    %v965 = vpack.c.b16 %v641, %v637
    %v966 = vpack.c.b16 %v646, %v642
    %v967 = vpack.c.b16 %v647, %v643
    %v968 = vpack.c.b16 %v648, %v644
    %v969 = vpack.c.b16 %v649, %v645
    %v970 = vpack.c.b16 %v654, %v650
    %v971 = vpack.c.b16 %v655, %v651
    %v972 = vpack.c.b16 %v656, %v652
    %v973 = vpack.c.b16 %v657, %v653
    %v974 = vpack.c.b16 %v662, %v658
    %v975 = vpack.c.b16 %v663, %v659
    %v976 = vpack.c.b16 %v664, %v660
    %v977 = vpack.c.b16 %v665, %v661
    %v978 = vpack.c.b16 %v670, %v666
    %v979 = vpack.c.b16 %v671, %v667
    %v980 = vpack.c.b16 %v672, %v668
    %v981 = vpack.c.b16 %v673, %v669
    %v982 = vpack.c.b16 %v678, %v674
    %v983 = vpack.c.b16 %v679, %v675
    %v984 = vpack.c.b16 %v680, %v676
    %v985 = vpack.c.b16 %v681, %v677
    %v986 = vpack.c.b16 %v686, %v682
    %v987 = vpack.c.b16 %v687, %v683
    %v988 = vpack.c.b16 %v688, %v684
    %v989 = vpack.c.b16 %v689, %v685
    %v990 = vpack.c.b16 %v694, %v690
    %v991 = vpack.c.b16 %v695, %v691
    %v992 = vpack.c.b16 %v696, %v692
    %v993 = vpack.c.b16 %v697, %v693
    %v994 = vpack.c.b16 %v702, %v698
    %v995 = vpack.c.b16 %v703, %v699
    %v996 = vpack.c.b16 %v704, %v700
    %v997 = vpack.c.b16 %v705, %v701
    %v998 = vpack.c.b16 %v710, %v706
    %v999 = vpack.c.b16 %v711, %v707
    %v1000 = vpack.c.b16 %v712, %v708
    %v1001 = vpack.c.b16 %v713, %v709
    %v1002 = vpack.c.b16 %v718, %v714
    %v1003 = vpack.c.b16 %v719, %v715
    %v1004 = vpack.c.b16 %v720, %v716
    %v1005 = vpack.c.b16 %v721, %v717
    %v1006 = vpack.c.b16 %v726, %v722
    %v1007 = vpack.c.b16 %v727, %v723
    %v1008 = vpack.c.b16 %v728, %v724
    %v1009 = vpack.c.b16 %v729, %v725
    %v1010 = vpack.c.b16 %v734, %v730
    %v1011 = vpack.c.b16 %v735, %v731
    %v1012 = vpack.c.b16 %v736, %v732
    %v1013 = vpack.c.b16 %v737, %v733
    %v1014 = vpack.c.b16 %v742, %v738
    %v1015 = vpack.c.b16 %v743, %v739
    %v1016 = vpack.c.b16 %v744, %v740
    %v1017 = vpack.c.b16 %v745, %v741
    %v1018 = vpack.c.b16 %v750, %v746
    %v1019 = vpack.c.b16 %v751, %v747
    %v1020 = vpack.c.b16 %v752, %v748
    %v1021 = vpack.c.b16 %v753, %v749
    %v1022 = vpack.c.b16 %v758, %v754
    %v1023 = vpack.c.b16 %v759, %v755
    %v1024 = vpack.c.b16 %v760, %v756
    %v1025 = vpack.c.b16 %v761, %v757
    %v1026 = vpack.c.b16 %v766, %v762
    %v1027 = vpack.c.b16 %v767, %v763
    %v1028 = vpack.c.b16 %v768, %v764
    %v1029 = vpack.c.b16 %v769, %v765
    %v1030 = vpack.c.b16 %v774, %v770
    %v1031 = vpack.c.b16 %v775, %v771
    %v1032 = vpack.c.b16 %v776, %v772
    %v1033 = vpack.c.b16 %v777, %v773
    %v1034 = vpack.c.b16 %v782, %v778
    %v1035 = vpack.c.b16 %v783, %v779
    %v1036 = vpack.c.b16 %v784, %v780
    %v1037 = vpack.c.b16 %v785, %v781
    %v1038 = vpack.c.b16 %v790, %v786
    %v1039 = vpack.c.b16 %v791, %v787
    %v1040 = vpack.c.b16 %v792, %v788
    %v1041 = vpack.c.b16 %v793, %v789
    %v1042 = vpack.c.b16 %v798, %v794
    %v1043 = vpack.c.b16 %v799, %v795
    %v1044 = vpack.c.b16 %v800, %v796
    %v1045 = vpack.c.b16 %v801, %v797
    %v1046 = vpack.c.b16 %v806, %v802
    %v1047 = vpack.c.b16 %v807, %v803
    %v1048 = vpack.c.b16 %v808, %v804
    %v1049 = vpack.c.b16 %v809, %v805
    %v1050 = vpack.c.b16 %v814, %v810
    %v1051 = vpack.c.b16 %v815, %v811
    %v1052 = vpack.c.b16 %v816, %v812
    %v1053 = vpack.c.b16 %v817, %v813
    %v1054 = vpack.c.b16 %v822, %v818
    %v1055 = vpack.c.b16 %v823, %v819
    %v1056 = vpack.c.b16 %v824, %v820
    %v1057 = vpack.c.b16 %v825, %v821
    %v1058 = vpack.c.b16 %v830, %v826
    %v1059 = vpack.c.b16 %v831, %v827
    %v1060 = vpack.c.b16 %v832, %v828
    %v1061 = vpack.c.b16 %v833, %v829
    %v1062 = vpack.c.b16 %v838, %v834
    %v1063 = vpack.c.b16 %v839, %v835
    %v1064 = vpack.c.b16 %v840, %v836
    %v1065 = vpack.c.b16 %v841, %v837
    %v1066 = vpack.c.b16 %v846, %v842
    %v1067 = vpack.c.b16 %v847, %v843
    %v1068 = vpack.c.b16 %v848, %v844
    %v1069 = vpack.c.b16 %v849, %v845
    %v1070 = vpack.c.b16 %v854, %v850
    %v1071 = vpack.c.b16 %v855, %v851
    %v1072 = vpack.c.b16 %v856, %v852
    %v1073 = vpack.c.b16 %v857, %v853
    %v1074 = vpack.c.b16 %v862, %v858
    %v1075 = vpack.c.b16 %v863, %v859
    %v1076 = vpack.c.b16 %v864, %v860
    %v1077 = vpack.c.b16 %v865, %v861
    %v1078 = vpack.c.b16 %v870, %v866
    %v1079 = vpack.c.b16 %v871, %v867
    %v1080 = vpack.c.b16 %v872, %v868
    %v1081 = vpack.c.b16 %v873, %v869
    %v1082 = vpack.c.b16 %v878, %v874
    %v1083 = vpack.c.b16 %v879, %v875
    %v1084 = vpack.c.b16 %v880, %v876
    %v1085 = vpack.c.b16 %v881, %v877
    %v1086 = vpack.c.b16 %v886, %v882
    %v1087 = vpack.c.b16 %v887, %v883
    %v1088 = vpack.c.b16 %v888, %v884
    %v1089 = vpack.c.b16 %v889, %v885
    %v1090 = vpack.c.b16 %v894, %v890
    %v1091 = vpack.c.b16 %v895, %v891
    %v1092 = vpack.c.b16 %v896, %v892
    %v1093 = vpack.c.b16 %v897, %v893
    %vm1290 = vcmask 130048
    %v1292 = vsel %vm1290, %v103, 0
    %1294 = vmatpush.bf16.msra.mxu0 %v926
    %1295 = vmatpush.bf16.msra.mxu0 %v922
    %1296 = vmatpush.bf16.msra.mxu0 %v918
    %1297 = vmatpush.bf16.msra.mxu0 %v914
    %1298 = vmatpush.bf16.msra.mxu0 %v910
    %1299 = vmatpush.bf16.msra.mxu0 %v906
    %1300 = vmatpush.bf16.msra.mxu0 %v902
    %1301 = vmatpush.bf16.msra.mxu0 %v898
    %1302 = vmatmul.bf16.gmra.mxu0 %v97
    %v1303 = vpop.f32.mrf.mxu0
    %v1304 = vadd.f32 %v302, %v1303
    %v1305 = vpop.f32.mrf.mxu0
    %v1306 = vadd.f32 %v302, %v1305
    %1307 = vdwg.mxu0
    %1308 = vmatpush.bf16.msra.mxu0 %v958
    %1309 = vmatpush.bf16.msra.mxu0 %v954
    %1310 = vmatpush.bf16.msra.mxu0 %v950
    %1311 = vmatpush.bf16.msra.mxu0 %v946
    %1312 = vmatpush.bf16.msra.mxu0 %v942
    %1313 = vmatpush.bf16.msra.mxu0 %v938
    %1314 = vmatpush.bf16.msra.mxu0 %v934
    %1315 = vmatpush.bf16.msra.mxu0 %v930
    %1316 = vmatmul.bf16.gmra.mxu0 %v98
    %v1317 = vpop.f32.mrf.mxu0
    %v1318 = vadd.f32 %v1304, %v1317
    %v1319 = vpop.f32.mrf.mxu0
    %v1320 = vadd.f32 %v1306, %v1319
    %1321 = vdwg.mxu0
    %1322 = vmatpush.bf16.msra.mxu0 %v990
    %1323 = vmatpush.bf16.msra.mxu0 %v986
    %1324 = vmatpush.bf16.msra.mxu0 %v982
    %1325 = vmatpush.bf16.msra.mxu0 %v978
    %1326 = vmatpush.bf16.msra.mxu0 %v974
    %1327 = vmatpush.bf16.msra.mxu0 %v970
    %1328 = vmatpush.bf16.msra.mxu0 %v966
    %1329 = vmatpush.bf16.msra.mxu0 %v962
    %1330 = vmatmul.bf16.gmra.mxu0 %v99
    %v1331 = vpop.f32.mrf.mxu0
    %v1332 = vadd.f32 %v1318, %v1331
    %v1333 = vpop.f32.mrf.mxu0
    %v1334 = vadd.f32 %v1320, %v1333
    %1335 = vdwg.mxu0
    %1336 = vmatpush.bf16.msra.mxu0 %v1022
    %1337 = vmatpush.bf16.msra.mxu0 %v1018
    %1338 = vmatpush.bf16.msra.mxu0 %v1014
    %1339 = vmatpush.bf16.msra.mxu0 %v1010
    %1340 = vmatpush.bf16.msra.mxu0 %v1006
    %1341 = vmatpush.bf16.msra.mxu0 %v1002
    %1342 = vmatpush.bf16.msra.mxu0 %v998
    %1343 = vmatpush.bf16.msra.mxu0 %v994
    %1344 = vmatmul.bf16.gmra.mxu0 %v100
    %v1345 = vpop.f32.mrf.mxu0
    %v1346 = vadd.f32 %v1332, %v1345
    %v1347 = vpop.f32.mrf.mxu0
    %v1348 = vadd.f32 %v1334, %v1347
    %1349 = vdwg.mxu0
    %1350 = vmatpush.bf16.msra.mxu0 %v1054
    %1351 = vmatpush.bf16.msra.mxu0 %v1050
    %1352 = vmatpush.bf16.msra.mxu0 %v1046
    %1353 = vmatpush.bf16.msra.mxu0 %v1042
    %1354 = vmatpush.bf16.msra.mxu0 %v1038
    %1355 = vmatpush.bf16.msra.mxu0 %v1034
    %1356 = vmatpush.bf16.msra.mxu0 %v1030
    %1357 = vmatpush.bf16.msra.mxu0 %v1026
    %1358 = vmatmul.bf16.gmra.mxu0 %v101
    %v1359 = vpop.f32.mrf.mxu0
    %v1360 = vadd.f32 %v1346, %v1359
    %v1361 = vpop.f32.mrf.mxu0
    %v1362 = vadd.f32 %v1348, %v1361
    %1363 = vdwg.mxu0
    %1364 = vmatpush.bf16.msra.mxu0 %v1086
    %1365 = vmatpush.bf16.msra.mxu0 %v1082
    %1366 = vmatpush.bf16.msra.mxu0 %v1078
    %1367 = vmatpush.bf16.msra.mxu0 %v1074
    %1368 = vmatpush.bf16.msra.mxu0 %v1070
    %1369 = vmatpush.bf16.msra.mxu0 %v1066
    %1370 = vmatpush.bf16.msra.mxu0 %v1062
    %1371 = vmatpush.bf16.msra.mxu0 %v1058
    %1372 = vmatmul.bf16.gmra.mxu0 %v102
    %v1373 = vpop.f32.mrf.mxu0
    %v1374 = vadd.f32 %v1360, %v1373
    %v1375 = vpop.f32.mrf.mxu0
    %v1376 = vadd.f32 %v1362, %v1375
    %1377 = vdwg.mxu0
    %1378 = vmatpush.bf16.msra.mxu0 0
    %1379 = vmatpush.bf16.msra.mxu0 0
    %1380 = vmatpush.bf16.msra.mxu0 0
    %1381 = vmatpush.bf16.msra.mxu0 0
    %1382 = vmatpush.bf16.msra.mxu0 0
    %1383 = vmatpush.bf16.msra.mxu0 0
    %1384 = vmatpush.bf16.msra.mxu0 0
    %1385 = vmatpush.bf16.msra.mxu0 %v1090
    %1386 = vmatmul.bf16.gmra.mxu0 %v1292
    %v1387 = vpop.f32.mrf.mxu0
    %v1388 = vadd.f32 %v1374, %v1387
    %v1389 = vpop.f32.mrf.mxu0
    %v1390 = vadd.f32 %v1376, %v1389
    %1391 = vdwg.mxu0
    %1392 = vmatpush.bf16.msra.mxu0 %v927
    %1393 = vmatpush.bf16.msra.mxu0 %v923
    %1394 = vmatpush.bf16.msra.mxu0 %v919
    %1395 = vmatpush.bf16.msra.mxu0 %v915
    %1396 = vmatpush.bf16.msra.mxu0 %v911
    %1397 = vmatpush.bf16.msra.mxu0 %v907
    %1398 = vmatpush.bf16.msra.mxu0 %v903
    %1399 = vmatpush.bf16.msra.mxu0 %v899
    %1400 = vmatmul.bf16.gmra.mxu0 %v97
    %v1401 = vpop.f32.mrf.mxu0
    %v1402 = vadd.f32 %v303, %v1401
    %v1403 = vpop.f32.mrf.mxu0
    %v1404 = vadd.f32 %v303, %v1403
    %1405 = vdwg.mxu0
    %1406 = vmatpush.bf16.msra.mxu0 %v959
    %1407 = vmatpush.bf16.msra.mxu0 %v955
    %1408 = vmatpush.bf16.msra.mxu0 %v951
    %1409 = vmatpush.bf16.msra.mxu0 %v947
    %1410 = vmatpush.bf16.msra.mxu0 %v943
    %1411 = vmatpush.bf16.msra.mxu0 %v939
    %1412 = vmatpush.bf16.msra.mxu0 %v935
    %1413 = vmatpush.bf16.msra.mxu0 %v931
    %1414 = vmatmul.bf16.gmra.mxu0 %v98
    %v1415 = vpop.f32.mrf.mxu0
    %v1416 = vadd.f32 %v1402, %v1415
    %v1417 = vpop.f32.mrf.mxu0
    %v1418 = vadd.f32 %v1404, %v1417
    %1419 = vdwg.mxu0
    %1420 = vmatpush.bf16.msra.mxu0 %v991
    %1421 = vmatpush.bf16.msra.mxu0 %v987
    %1422 = vmatpush.bf16.msra.mxu0 %v983
    %1423 = vmatpush.bf16.msra.mxu0 %v979
    %1424 = vmatpush.bf16.msra.mxu0 %v975
    %1425 = vmatpush.bf16.msra.mxu0 %v971
    %1426 = vmatpush.bf16.msra.mxu0 %v967
    %1427 = vmatpush.bf16.msra.mxu0 %v963
    %1428 = vmatmul.bf16.gmra.mxu0 %v99
    %v1429 = vpop.f32.mrf.mxu0
    %v1430 = vadd.f32 %v1416, %v1429
    %v1431 = vpop.f32.mrf.mxu0
    %v1432 = vadd.f32 %v1418, %v1431
    %1433 = vdwg.mxu0
    %1434 = vmatpush.bf16.msra.mxu0 %v1023
    %1435 = vmatpush.bf16.msra.mxu0 %v1019
    %1436 = vmatpush.bf16.msra.mxu0 %v1015
    %1437 = vmatpush.bf16.msra.mxu0 %v1011
    %1438 = vmatpush.bf16.msra.mxu0 %v1007
    %1439 = vmatpush.bf16.msra.mxu0 %v1003
    %1440 = vmatpush.bf16.msra.mxu0 %v999
    %1441 = vmatpush.bf16.msra.mxu0 %v995
    %1442 = vmatmul.bf16.gmra.mxu0 %v100
    %v1443 = vpop.f32.mrf.mxu0
    %v1444 = vadd.f32 %v1430, %v1443
    %v1445 = vpop.f32.mrf.mxu0
    %v1446 = vadd.f32 %v1432, %v1445
    %1447 = vdwg.mxu0
    %1448 = vmatpush.bf16.msra.mxu0 %v1055
    %1449 = vmatpush.bf16.msra.mxu0 %v1051
    %1450 = vmatpush.bf16.msra.mxu0 %v1047
    %1451 = vmatpush.bf16.msra.mxu0 %v1043
    %1452 = vmatpush.bf16.msra.mxu0 %v1039
    %1453 = vmatpush.bf16.msra.mxu0 %v1035
    %1454 = vmatpush.bf16.msra.mxu0 %v1031
    %1455 = vmatpush.bf16.msra.mxu0 %v1027
    %1456 = vmatmul.bf16.gmra.mxu0 %v101
    %v1457 = vpop.f32.mrf.mxu0
    %v1458 = vadd.f32 %v1444, %v1457
    %v1459 = vpop.f32.mrf.mxu0
    %v1460 = vadd.f32 %v1446, %v1459
    %1461 = vdwg.mxu0
    %1462 = vmatpush.bf16.msra.mxu0 %v1087
    %1463 = vmatpush.bf16.msra.mxu0 %v1083
    %1464 = vmatpush.bf16.msra.mxu0 %v1079
    %1465 = vmatpush.bf16.msra.mxu0 %v1075
    %1466 = vmatpush.bf16.msra.mxu0 %v1071
    %1467 = vmatpush.bf16.msra.mxu0 %v1067
    %1468 = vmatpush.bf16.msra.mxu0 %v1063
    %1469 = vmatpush.bf16.msra.mxu0 %v1059
    %1470 = vmatmul.bf16.gmra.mxu0 %v102
    %v1471 = vpop.f32.mrf.mxu0
    %v1472 = vadd.f32 %v1458, %v1471
    %v1473 = vpop.f32.mrf.mxu0
    %v1474 = vadd.f32 %v1460, %v1473
    %1475 = vdwg.mxu0
    %1476 = vmatpush.bf16.msra.mxu0 0
    %1477 = vmatpush.bf16.msra.mxu0 0
    %1478 = vmatpush.bf16.msra.mxu0 0
    %1479 = vmatpush.bf16.msra.mxu0 0
    %1480 = vmatpush.bf16.msra.mxu0 0
    %1481 = vmatpush.bf16.msra.mxu0 0
    %1482 = vmatpush.bf16.msra.mxu0 0
    %1483 = vmatpush.bf16.msra.mxu0 %v1091
    %1484 = vmatmul.bf16.gmra.mxu0 %v1292
    %v1485 = vpop.f32.mrf.mxu0
    %v1486 = vadd.f32 %v1472, %v1485
    %v1487 = vpop.f32.mrf.mxu0
    %v1488 = vadd.f32 %v1474, %v1487
    %1489 = vdwg.mxu0
    %1490 = vmatpush.bf16.msra.mxu0 %v928
    %1491 = vmatpush.bf16.msra.mxu0 %v924
    %1492 = vmatpush.bf16.msra.mxu0 %v920
    %1493 = vmatpush.bf16.msra.mxu0 %v916
    %1494 = vmatpush.bf16.msra.mxu0 %v912
    %1495 = vmatpush.bf16.msra.mxu0 %v908
    %1496 = vmatpush.bf16.msra.mxu0 %v904
    %1497 = vmatpush.bf16.msra.mxu0 %v900
    %1498 = vmatmul.bf16.gmra.mxu0 %v97
    %v1499 = vpop.f32.mrf.mxu0
    %v1500 = vadd.f32 %v304, %v1499
    %v1501 = vpop.f32.mrf.mxu0
    %v1502 = vadd.f32 %v304, %v1501
    %1503 = vdwg.mxu0
    %1504 = vmatpush.bf16.msra.mxu0 %v960
    %1505 = vmatpush.bf16.msra.mxu0 %v956
    %1506 = vmatpush.bf16.msra.mxu0 %v952
    %1507 = vmatpush.bf16.msra.mxu0 %v948
    %1508 = vmatpush.bf16.msra.mxu0 %v944
    %1509 = vmatpush.bf16.msra.mxu0 %v940
    %1510 = vmatpush.bf16.msra.mxu0 %v936
    %1511 = vmatpush.bf16.msra.mxu0 %v932
    %1512 = vmatmul.bf16.gmra.mxu0 %v98
    %v1513 = vpop.f32.mrf.mxu0
    %v1514 = vadd.f32 %v1500, %v1513
    %v1515 = vpop.f32.mrf.mxu0
    %v1516 = vadd.f32 %v1502, %v1515
    %1517 = vdwg.mxu0
    %1518 = vmatpush.bf16.msra.mxu0 %v992
    %1519 = vmatpush.bf16.msra.mxu0 %v988
    %1520 = vmatpush.bf16.msra.mxu0 %v984
    %1521 = vmatpush.bf16.msra.mxu0 %v980
    %1522 = vmatpush.bf16.msra.mxu0 %v976
    %1523 = vmatpush.bf16.msra.mxu0 %v972
    %1524 = vmatpush.bf16.msra.mxu0 %v968
    %1525 = vmatpush.bf16.msra.mxu0 %v964
    %1526 = vmatmul.bf16.gmra.mxu0 %v99
    %v1527 = vpop.f32.mrf.mxu0
    %v1528 = vadd.f32 %v1514, %v1527
    %v1529 = vpop.f32.mrf.mxu0
    %v1530 = vadd.f32 %v1516, %v1529
    %1531 = vdwg.mxu0
    %1532 = vmatpush.bf16.msra.mxu0 %v1024
    %1533 = vmatpush.bf16.msra.mxu0 %v1020
    %1534 = vmatpush.bf16.msra.mxu0 %v1016
    %1535 = vmatpush.bf16.msra.mxu0 %v1012
    %1536 = vmatpush.bf16.msra.mxu0 %v1008
    %1537 = vmatpush.bf16.msra.mxu0 %v1004
    %1538 = vmatpush.bf16.msra.mxu0 %v1000
    %1539 = vmatpush.bf16.msra.mxu0 %v996
    %1540 = vmatmul.bf16.gmra.mxu0 %v100
    %v1541 = vpop.f32.mrf.mxu0
    %v1542 = vadd.f32 %v1528, %v1541
    %v1543 = vpop.f32.mrf.mxu0
    %v1544 = vadd.f32 %v1530, %v1543
    %1545 = vdwg.mxu0
    %1546 = vmatpush.bf16.msra.mxu0 %v1056
    %1547 = vmatpush.bf16.msra.mxu0 %v1052
    %1548 = vmatpush.bf16.msra.mxu0 %v1048
    %1549 = vmatpush.bf16.msra.mxu0 %v1044
    %1550 = vmatpush.bf16.msra.mxu0 %v1040
    %1551 = vmatpush.bf16.msra.mxu0 %v1036
    %1552 = vmatpush.bf16.msra.mxu0 %v1032
    %1553 = vmatpush.bf16.msra.mxu0 %v1028
    %1554 = vmatmul.bf16.gmra.mxu0 %v101
    %v1555 = vpop.f32.mrf.mxu0
    %v1556 = vadd.f32 %v1542, %v1555
    %v1557 = vpop.f32.mrf.mxu0
    %v1558 = vadd.f32 %v1544, %v1557
    %1559 = vdwg.mxu0
    %1560 = vmatpush.bf16.msra.mxu0 %v1088
    %1561 = vmatpush.bf16.msra.mxu0 %v1084
    %1562 = vmatpush.bf16.msra.mxu0 %v1080
    %1563 = vmatpush.bf16.msra.mxu0 %v1076
    %1564 = vmatpush.bf16.msra.mxu0 %v1072
    %1565 = vmatpush.bf16.msra.mxu0 %v1068
    %1566 = vmatpush.bf16.msra.mxu0 %v1064
    %1567 = vmatpush.bf16.msra.mxu0 %v1060
    %1568 = vmatmul.bf16.gmra.mxu0 %v102
    %v1569 = vpop.f32.mrf.mxu0
    %v1570 = vadd.f32 %v1556, %v1569
    %v1571 = vpop.f32.mrf.mxu0
    %v1572 = vadd.f32 %v1558, %v1571
    %1573 = vdwg.mxu0
    %1574 = vmatpush.bf16.msra.mxu0 0
    %1575 = vmatpush.bf16.msra.mxu0 0
    %1576 = vmatpush.bf16.msra.mxu0 0
    %1577 = vmatpush.bf16.msra.mxu0 0
    %1578 = vmatpush.bf16.msra.mxu0 0
    %1579 = vmatpush.bf16.msra.mxu0 0
    %1580 = vmatpush.bf16.msra.mxu0 0
    %1581 = vmatpush.bf16.msra.mxu0 %v1092
    %1582 = vmatmul.bf16.gmra.mxu0 %v1292
    %v1583 = vpop.f32.mrf.mxu0
    %v1584 = vadd.f32 %v1570, %v1583
    %v1585 = vpop.f32.mrf.mxu0
    %v1586 = vadd.f32 %v1572, %v1585
    %1587 = vdwg.mxu0
    %1588 = vmatpush.bf16.msra.mxu0 %v929
    %1589 = vmatpush.bf16.msra.mxu0 %v925
    %1590 = vmatpush.bf16.msra.mxu0 %v921
    %1591 = vmatpush.bf16.msra.mxu0 %v917
    %1592 = vmatpush.bf16.msra.mxu0 %v913
    %1593 = vmatpush.bf16.msra.mxu0 %v909
    %1594 = vmatpush.bf16.msra.mxu0 %v905
    %1595 = vmatpush.bf16.msra.mxu0 %v901
    %1596 = vmatmul.bf16.gmra.mxu0 %v97
    %v1597 = vpop.f32.mrf.mxu0
    %v1598 = vadd.f32 %v305, %v1597
    %v1599 = vpop.f32.mrf.mxu0
    %v1600 = vadd.f32 %v305, %v1599
    %1601 = vdwg.mxu0
    %1602 = vmatpush.bf16.msra.mxu0 %v961
    %1603 = vmatpush.bf16.msra.mxu0 %v957
    %1604 = vmatpush.bf16.msra.mxu0 %v953
    %1605 = vmatpush.bf16.msra.mxu0 %v949
    %1606 = vmatpush.bf16.msra.mxu0 %v945
    %1607 = vmatpush.bf16.msra.mxu0 %v941
    %1608 = vmatpush.bf16.msra.mxu0 %v937
    %1609 = vmatpush.bf16.msra.mxu0 %v933
    %1610 = vmatmul.bf16.gmra.mxu0 %v98
    %v1611 = vpop.f32.mrf.mxu0
    %v1612 = vadd.f32 %v1598, %v1611
    %v1613 = vpop.f32.mrf.mxu0
    %v1614 = vadd.f32 %v1600, %v1613
    %1615 = vdwg.mxu0
    %1616 = vmatpush.bf16.msra.mxu0 %v993
    %1617 = vmatpush.bf16.msra.mxu0 %v989
    %1618 = vmatpush.bf16.msra.mxu0 %v985
    %1619 = vmatpush.bf16.msra.mxu0 %v981
    %1620 = vmatpush.bf16.msra.mxu0 %v977
    %1621 = vmatpush.bf16.msra.mxu0 %v973
    %1622 = vmatpush.bf16.msra.mxu0 %v969
    %1623 = vmatpush.bf16.msra.mxu0 %v965
    %1624 = vmatmul.bf16.gmra.mxu0 %v99
    %v1625 = vpop.f32.mrf.mxu0
    %v1626 = vadd.f32 %v1612, %v1625
    %v1627 = vpop.f32.mrf.mxu0
    %v1628 = vadd.f32 %v1614, %v1627
    %1629 = vdwg.mxu0
    %1630 = vmatpush.bf16.msra.mxu0 %v1025
    %1631 = vmatpush.bf16.msra.mxu0 %v1021
    %1632 = vmatpush.bf16.msra.mxu0 %v1017
    %1633 = vmatpush.bf16.msra.mxu0 %v1013
    %1634 = vmatpush.bf16.msra.mxu0 %v1009
    %1635 = vmatpush.bf16.msra.mxu0 %v1005
    %1636 = vmatpush.bf16.msra.mxu0 %v1001
    %1637 = vmatpush.bf16.msra.mxu0 %v997
    %1638 = vmatmul.bf16.gmra.mxu0 %v100
    %v1639 = vpop.f32.mrf.mxu0
    %v1640 = vadd.f32 %v1626, %v1639
    %v1641 = vpop.f32.mrf.mxu0
    %v1642 = vadd.f32 %v1628, %v1641
    %1643 = vdwg.mxu0
    %1644 = vmatpush.bf16.msra.mxu0 %v1057
    %1645 = vmatpush.bf16.msra.mxu0 %v1053
    %1646 = vmatpush.bf16.msra.mxu0 %v1049
    %1647 = vmatpush.bf16.msra.mxu0 %v1045
    %1648 = vmatpush.bf16.msra.mxu0 %v1041
    %1649 = vmatpush.bf16.msra.mxu0 %v1037
    %1650 = vmatpush.bf16.msra.mxu0 %v1033
    %1651 = vmatpush.bf16.msra.mxu0 %v1029
    %1652 = vmatmul.bf16.gmra.mxu0 %v101
    %v1653 = vpop.f32.mrf.mxu0
    %v1654 = vadd.f32 %v1640, %v1653
    %v1655 = vpop.f32.mrf.mxu0
    %v1656 = vadd.f32 %v1642, %v1655
    %1657 = vdwg.mxu0
    %1658 = vmatpush.bf16.msra.mxu0 %v1089
    %1659 = vmatpush.bf16.msra.mxu0 %v1085
    %1660 = vmatpush.bf16.msra.mxu0 %v1081
    %1661 = vmatpush.bf16.msra.mxu0 %v1077
    %1662 = vmatpush.bf16.msra.mxu0 %v1073
    %1663 = vmatpush.bf16.msra.mxu0 %v1069
    %1664 = vmatpush.bf16.msra.mxu0 %v1065
    %1665 = vmatpush.bf16.msra.mxu0 %v1061
    %1666 = vmatmul.bf16.gmra.mxu0 %v102
    %v1667 = vpop.f32.mrf.mxu0
    %v1668 = vadd.f32 %v1654, %v1667
    %v1669 = vpop.f32.mrf.mxu0
    %v1670 = vadd.f32 %v1656, %v1669
    %1671 = vdwg.mxu0
    %1672 = vmatpush.bf16.msra.mxu0 0
    %1673 = vmatpush.bf16.msra.mxu0 0
    %1674 = vmatpush.bf16.msra.mxu0 0
    %1675 = vmatpush.bf16.msra.mxu0 0
    %1676 = vmatpush.bf16.msra.mxu0 0
    %1677 = vmatpush.bf16.msra.mxu0 0
    %1678 = vmatpush.bf16.msra.mxu0 0
    %1679 = vmatpush.bf16.msra.mxu0 %v1093
    %1680 = vmatmul.bf16.gmra.mxu0 %v1292
    %v1681 = vpop.f32.mrf.mxu0
    %v1682 = vadd.f32 %v1668, %v1681
    %v1683 = vpop.f32.mrf.mxu0
    %v1684 = vadd.f32 %v1670, %v1683
    %1685 = vdwg.mxu0
    %v1686 = vmax.f32 %v1388, 0.0
    %v1687 = vmax.f32 %v1486, 0.0
    %v1688 = vmax.f32 %v1584, 0.0
    %v1689 = vmax.f32 %v1682, 0.0
    %v1690 = vmax.f32 %v1390, 0.0
    %v1691 = vmax.f32 %v1488, 0.0
    %v1692 = vmax.f32 %v1586, 0.0
    %v1693 = vmax.f32 %v1684, 0.0
    %v1694 = vpack.c.bf16 %v1690, %v1686
    %v1695 = vpack.c.bf16 %v1691, %v1687
    %v1696 = vpack.c.bf16 %v1692, %v1688
    %v1697 = vpack.c.bf16 %v1693, %v1689
    %v1698 = vld [vmem:[#allocation8] sm:$0xf]
    %v1699 = vld [vmem:[#allocation8 + $0x4] sm:$0xf]
    %v1700 = vld [vmem:[#allocation8 + $0x8] sm:$0xf]
    %v1701 = vld [vmem:[#allocation8 + $0xc] sm:$0xf]
    %v1702 = vld [vmem:[#allocation8 + $0x10] sm:$0xf]
    %v1703 = vld [vmem:[#allocation8 + $0x14] sm:$0xf]
    %v1704 = vld [vmem:[#allocation8 + $0x18] sm:$0xf]
    %v1705 = vld [vmem:[#allocation8 + $0x1c] sm:$0xf]
    %v1706 = vld [vmem:[#allocation8 + $0x20] sm:$0xf]
    %v1707 = vld [vmem:[#allocation8 + $0x24] sm:$0xf]
    %v1708 = vld [vmem:[#allocation8 + $0x28] sm:$0xf]
    %v1709 = vld [vmem:[#allocation8 + $0x2c] sm:$0xf]
    %v1710 = vld [vmem:[#allocation8 + $0x30] sm:$0xf]
    %v1711 = vld [vmem:[#allocation8 + $0x34] sm:$0xf]
    %v1712 = vld [vmem:[#allocation8 + $0x38] sm:$0xf]
    %v1713 = vld [vmem:[#allocation8 + $0x3c] sm:$0xf]
    %v1714 = vld [vmem:[#allocation8 + $0x40] sm:$0xf]
    %v1715 = vld [vmem:[#allocation8 + $0x44] sm:$0xf]
    %v1716 = vld [vmem:[#allocation8 + $0x48] sm:$0xf]
    %v1717 = vld [vmem:[#allocation8 + $0x4c] sm:$0xf]
    %v1718 = vld [vmem:[#allocation8 + $0x50] sm:$0xf]
    %v1719 = vld [vmem:[#allocation8 + $0x54] sm:$0xf]
    %v1720 = vld [vmem:[#allocation8 + $0x58] sm:$0xf]
    %v1721 = vld [vmem:[#allocation8 + $0x5c] sm:$0xf]
    %v1722 = vld [vmem:[#allocation8 + $0x60] sm:$0xf]
    %v1723 = vld [vmem:[#allocation8 + $0x64] sm:$0xf]
    %v1724 = vld [vmem:[#allocation8 + $0x68] sm:$0xf]
    %v1725 = vld [vmem:[#allocation8 + $0x6c] sm:$0xf]
    %v1726 = vld [vmem:[#allocation8 + $0x70] sm:$0xf]
    %v1727 = vld [vmem:[#allocation8 + $0x74] sm:$0xf]
    %v1728 = vld [vmem:[#allocation8 + $0x78] sm:$0xf]
    %v1729 = vld [vmem:[#allocation8 + $0x7c] sm:$0xf]
    %v1730 = vld [vmem:[#allocation8 + $0x80] sm:$0xf]
    %v1731 = vld [vmem:[#allocation8 + $0x84] sm:$0xf]
    %v1732 = vld [vmem:[#allocation8 + $0x88] sm:$0xf]
    %v1733 = vld [vmem:[#allocation8 + $0x8c] sm:$0xf]
    %v1734 = vld [vmem:[#allocation8 + $0x90] sm:$0xf]
    %v1735 = vld [vmem:[#allocation8 + $0x94] sm:$0xf]
    %v1736 = vld [vmem:[#allocation8 + $0x98] sm:$0xf]
    %v1737 = vld [vmem:[#allocation8 + $0x9c] sm:$0xf]
    %v1738 = vld [vmem:[#allocation8 + $0xa0] sm:$0xf]
    %v1739 = vld [vmem:[#allocation8 + $0xa4] sm:$0xf]
    %v1740 = vld [vmem:[#allocation8 + $0xa8] sm:$0xf]
    %v1741 = vld [vmem:[#allocation8 + $0xac] sm:$0xf]
    %v1742 = vld [vmem:[#allocation8 + $0xb0] sm:$0xf]
    %v1743 = vld [vmem:[#allocation8 + $0xb4] sm:$0xf]
    %v1744 = vld [vmem:[#allocation8 + $0xb8] sm:$0xf]
    %v1745 = vld [vmem:[#allocation8 + $0xbc] sm:$0xf]
    %v1746 = vld [vmem:[#allocation8 + $0xc0] sm:$0xf]
    %v1747 = vld [vmem:[#allocation8 + $0xc4] sm:$0xf]
    %v1748 = vld [vmem:[#allocation8 + $0xc8] sm:$0xf]
    %v1749 = vld [vmem:[#allocation8 + $0xcc] sm:$0xf]
    %v1750 = vld [vmem:[#allocation8 + $0xd0] sm:$0xf]
    %v1751 = vld [vmem:[#allocation8 + $0xd4] sm:$0xf]
    %v1752 = vld [vmem:[#allocation8 + $0xd8] sm:$0xf]
    %v1753 = vld [vmem:[#allocation8 + $0xdc] sm:$0xf]
    %v1754 = vld [vmem:[#allocation8 + $0xe0] sm:$0xf]
    %v1755 = vld [vmem:[#allocation8 + $0xe4] sm:$0xf]
    %v1756 = vld [vmem:[#allocation8 + $0xe8] sm:$0xf]
    %v1757 = vld [vmem:[#allocation8 + $0xec] sm:$0xf]
    %v1758 = vld [vmem:[#allocation8 + $0xf0] sm:$0xf]
    %v1759 = vld [vmem:[#allocation8 + $0xf4] sm:$0xf]
    %v1760 = vld [vmem:[#allocation8 + $0xf8] sm:$0xf]
    %v1761 = vld [vmem:[#allocation8 + $0xfc] sm:$0xf]
    %v1762 = vld [vmem:[%s4] sm:$0x1]
    %v1764 = vperm.slane %v1762, 0
    %v1830 = vunpack.c.l.b16 %v1698
    %v1831 = vunpack.c.l.b16 %v1699
    %v1832 = vunpack.c.l.b16 %v1700
    %v1833 = vunpack.c.l.b16 %v1701
    %v1834 = vunpack.c.l.b16 %v1702
    %v1835 = vunpack.c.l.b16 %v1703
    %v1836 = vunpack.c.l.b16 %v1704
    %v1837 = vunpack.c.l.b16 %v1705
    %v1838 = vunpack.c.l.b16 %v1706
    %v1839 = vunpack.c.l.b16 %v1707
    %v1840 = vunpack.c.l.b16 %v1708
    %v1841 = vunpack.c.l.b16 %v1709
    %v1842 = vunpack.c.l.b16 %v1710
    %v1843 = vunpack.c.l.b16 %v1711
    %v1844 = vunpack.c.l.b16 %v1712
    %v1845 = vunpack.c.l.b16 %v1713
    %v1846 = vunpack.c.l.b16 %v1714
    %v1847 = vunpack.c.l.b16 %v1715
    %v1848 = vunpack.c.l.b16 %v1716
    %v1849 = vunpack.c.l.b16 %v1717
    %v1850 = vunpack.c.l.b16 %v1718
    %v1851 = vunpack.c.l.b16 %v1719
    %v1852 = vunpack.c.l.b16 %v1720
    %v1853 = vunpack.c.l.b16 %v1721
    %v1854 = vunpack.c.l.b16 %v1722
    %v1855 = vunpack.c.l.b16 %v1723
    %v1856 = vunpack.c.l.b16 %v1724
    %v1857 = vunpack.c.l.b16 %v1725
    %v1858 = vunpack.c.l.b16 %v1726
    %v1859 = vunpack.c.l.b16 %v1727
    %v1860 = vunpack.c.l.b16 %v1728
    %v1861 = vunpack.c.l.b16 %v1729
    %v1862 = vunpack.c.l.b16 %v1730
    %v1863 = vunpack.c.l.b16 %v1731
    %v1864 = vunpack.c.l.b16 %v1732
    %v1865 = vunpack.c.l.b16 %v1733
    %v1866 = vunpack.c.l.b16 %v1734
    %v1867 = vunpack.c.l.b16 %v1735
    %v1868 = vunpack.c.l.b16 %v1736
    %v1869 = vunpack.c.l.b16 %v1737
    %v1870 = vunpack.c.l.b16 %v1738
    %v1871 = vunpack.c.l.b16 %v1739
    %v1872 = vunpack.c.l.b16 %v1740
    %v1873 = vunpack.c.l.b16 %v1741
    %v1874 = vunpack.c.l.b16 %v1742
    %v1875 = vunpack.c.l.b16 %v1743
    %v1876 = vunpack.c.l.b16 %v1744
    %v1877 = vunpack.c.l.b16 %v1745
    %v1878 = vunpack.c.l.b16 %v1746
    %v1879 = vunpack.c.l.b16 %v1747
    %v1880 = vunpack.c.l.b16 %v1748
    %v1881 = vunpack.c.l.b16 %v1749
    %v1882 = vunpack.c.l.b16 %v1750
    %v1883 = vunpack.c.l.b16 %v1751
    %v1884 = vunpack.c.l.b16 %v1752
    %v1885 = vunpack.c.l.b16 %v1753
    %v1886 = vunpack.c.l.b16 %v1754
    %v1887 = vunpack.c.l.b16 %v1755
    %v1888 = vunpack.c.l.b16 %v1756
    %v1889 = vunpack.c.l.b16 %v1757
    %v1890 = vunpack.c.l.b16 %v1758
    %v1891 = vunpack.c.l.b16 %v1759
    %v1892 = vunpack.c.l.b16 %v1760
    %v1893 = vunpack.c.l.b16 %v1761
    %v1894 = vpack.c.b16 %v1831, %v1830
    %v1895 = vpack.c.b16 %v1833, %v1832
    %v1896 = vpack.c.b16 %v1835, %v1834
    %v1897 = vpack.c.b16 %v1837, %v1836
    %v1898 = vpack.c.b16 %v1839, %v1838
    %v1899 = vpack.c.b16 %v1841, %v1840
    %v1900 = vpack.c.b16 %v1843, %v1842
    %v1901 = vpack.c.b16 %v1845, %v1844
    %v1902 = vpack.c.b16 %v1847, %v1846
    %v1903 = vpack.c.b16 %v1849, %v1848
    %v1904 = vpack.c.b16 %v1851, %v1850
    %v1905 = vpack.c.b16 %v1853, %v1852
    %v1906 = vpack.c.b16 %v1855, %v1854
    %v1907 = vpack.c.b16 %v1857, %v1856
    %v1908 = vpack.c.b16 %v1859, %v1858
    %v1909 = vpack.c.b16 %v1861, %v1860
    %v1910 = vpack.c.b16 %v1863, %v1862
    %v1911 = vpack.c.b16 %v1865, %v1864
    %v1912 = vpack.c.b16 %v1867, %v1866
    %v1913 = vpack.c.b16 %v1869, %v1868
    %v1914 = vpack.c.b16 %v1871, %v1870
    %v1915 = vpack.c.b16 %v1873, %v1872
    %v1916 = vpack.c.b16 %v1875, %v1874
    %v1917 = vpack.c.b16 %v1877, %v1876
    %v1918 = vpack.c.b16 %v1879, %v1878
    %v1919 = vpack.c.b16 %v1881, %v1880
    %v1920 = vpack.c.b16 %v1883, %v1882
    %v1921 = vpack.c.b16 %v1885, %v1884
    %v1922 = vpack.c.b16 %v1887, %v1886
    %v1923 = vpack.c.b16 %v1889, %v1888
    %v1924 = vpack.c.b16 %v1891, %v1890
    %v1925 = vpack.c.b16 %v1893, %v1892
    %1958 = vmatpush.bf16.msra.mxu0 %v1901
    %1959 = vmatpush.bf16.msra.mxu0 %v1900
    %1960 = vmatpush.bf16.msra.mxu0 %v1899
    %1961 = vmatpush.bf16.msra.mxu0 %v1898
    %1962 = vmatpush.bf16.msra.mxu0 %v1897
    %1963 = vmatpush.bf16.msra.mxu0 %v1896
    %1964 = vmatpush.bf16.msra.mxu0 %v1895
    %1965 = vmatpush.bf16.msra.mxu0 %v1894
    %1966 = vmatmul.bf16.gmra.mxu0 %v1694
    %v1967 = vpop.f32.mrf.mxu0
    %v1968 = vadd.f32 %v1764, %v1967
    %v1969 = vpop.f32.mrf.mxu0
    %v1970 = vadd.f32 %v1764, %v1969
    %1971 = vdwg.mxu0
    %1972 = vmatpush.bf16.msra.mxu0 %v1909
    %1973 = vmatpush.bf16.msra.mxu0 %v1908
    %1974 = vmatpush.bf16.msra.mxu0 %v1907
    %1975 = vmatpush.bf16.msra.mxu0 %v1906
    %1976 = vmatpush.bf16.msra.mxu0 %v1905
    %1977 = vmatpush.bf16.msra.mxu0 %v1904
    %1978 = vmatpush.bf16.msra.mxu0 %v1903
    %1979 = vmatpush.bf16.msra.mxu0 %v1902
    %1980 = vmatmul.bf16.gmra.mxu0 %v1695
    %v1981 = vpop.f32.mrf.mxu0
    %v1982 = vadd.f32 %v1968, %v1981
    %v1983 = vpop.f32.mrf.mxu0
    %v1984 = vadd.f32 %v1970, %v1983
    %1985 = vdwg.mxu0
    %1986 = vmatpush.bf16.msra.mxu0 %v1917
    %1987 = vmatpush.bf16.msra.mxu0 %v1916
    %1988 = vmatpush.bf16.msra.mxu0 %v1915
    %1989 = vmatpush.bf16.msra.mxu0 %v1914
    %1990 = vmatpush.bf16.msra.mxu0 %v1913
    %1991 = vmatpush.bf16.msra.mxu0 %v1912
    %1992 = vmatpush.bf16.msra.mxu0 %v1911
    %1993 = vmatpush.bf16.msra.mxu0 %v1910
    %1994 = vmatmul.bf16.gmra.mxu0 %v1696
    %v1995 = vpop.f32.mrf.mxu0
    %v1996 = vadd.f32 %v1982, %v1995
    %v1997 = vpop.f32.mrf.mxu0
    %v1998 = vadd.f32 %v1984, %v1997
    %1999 = vdwg.mxu0
    %2000 = vmatpush.bf16.msra.mxu0 %v1925
    %2001 = vmatpush.bf16.msra.mxu0 %v1924
    %2002 = vmatpush.bf16.msra.mxu0 %v1923
    %2003 = vmatpush.bf16.msra.mxu0 %v1922
    %2004 = vmatpush.bf16.msra.mxu0 %v1921
    %2005 = vmatpush.bf16.msra.mxu0 %v1920
    %2006 = vmatpush.bf16.msra.mxu0 %v1919
    %2007 = vmatpush.bf16.msra.mxu0 %v1918
    %2008 = vmatmul.bf16.gmra.mxu0 %v1697
    %v2009 = vpop.f32.mrf.mxu0
    %v2010 = vadd.f32 %v1996, %v2009
    %v2011 = vpop.f32.mrf.mxu0
    %v2012 = vadd.f32 %v1998, %v2011
    %2013 = vdwg.mxu0
    %v2014 = vpack.c.bf16 %v2010, %v2010
    %v2015 = vpack.c.bf16 %v2012, %v2012
    %2016 = vst [vmem:[#allocation10] sm:$0xf] %v2014
    %2017 = vst [vmem:[#allocation10 + $0x4] sm:$0xf] %v2015
    // Predicated region
    $region38: #{tpu_custom_call.1} parent=1 // pred_check
      _
    $region39: #{tpu_custom_call.1} parent=1 // pred_check_branch
      %2019 = sbr.rel (0) target = $region41
    $region40: #{tpu_custom_call.1} parent=1 // pred_region
      %2021 = vsyncadd [#allocation4], 0
      %s2022 = sshll.u32 [#allocation10], 4
      %s2023 = int_to_ptr.vmem [resolvable:$true] %s2022
      %s2024 = sshll.u32 %s5, 4
      %s2025 = int_to_ptr.hbm [resolvable:$true] %s2024
      %2030 = dma.vmem_to_hbm [thread:$0]  %s2023, 128, %s2025, [#allocation4], 64, 64, 4
    $region41: #{tpu_custom_call.1} parent=1 // pred_fallthru
      _
    // Predicated region
    $region42: #{tpu_custom_call.1} parent=1 // pred_check
      _
    $region43: #{tpu_custom_call.1} parent=1 // pred_check_branch
      %2032 = sbr.rel (0) target = $region45
    $region44: #{tpu_custom_call.1} parent=1 // pred_region
      %2034 = dma.done [#allocation4], 128
    $region45: #{tpu_custom_call.1} parent=1 // pred_fallthru
      _
    %2035 = vsyncpa [#allocation3], 1
    %2036 = vsyncpa [#allocation6], 1
    %2037 = vsyncpa [#allocation9], 1
    %2038 = vsyncpa [#allocation4], 1

</llo_original>
